<compile_context>
chip_gen: v6e
topology: v6e:2x2x1
jax: 0.10.0
libtpu: 0.0.40
codegen_flags: <defaults>
</compile_context>

<pallas_src>
import functools

import jax
import jax.numpy as jnp
from jax import lax
from jax.experimental import pallas as pl
from jax.experimental.pallas import tpu as pltpu


def _reorder_gates_last_axis(w):
    """PyTorch gate order i|f|g|o -> i|f|o|g along the last (4H) axis."""
    H = w.shape[-1] // 4
    return jnp.concatenate([w[..., : 2 * H], w[..., 3 * H:], w[..., 2 * H: 3 * H]],
                           axis=-1)


def _pick_block_t(T, dtype):
    """Time-block size: whole axis for small T, else a sublane-legal divisor."""
    if T <= 32:
        return T
    sub = 16 if dtype == jnp.bfloat16 else 8
    for cand in (64, 32, 16, 8):
        if cand % sub == 0 and T % cand == 0:
            return cand
    return T  # whole axis is always legal


def _lstm_kernel(max_len_ref,            # SMEM [1] i32 (scalar prefetch)
                 len_ref,                # VMEM [bB, 1]   i32
                 xp_ref,                 # VMEM [bB, bT, 4H]  x@W_ih^T + b (i|f|o|g)
                 whh_ref,                # VMEM [H, 4H]
                 wfc_ref,                # VMEM [H, Opad]
                 bfc_ref,                # VMEM [1, Opad]
                 out_ref,                # VMEM [bB, Opad]
                 h_sc, c_sc, hl_sc,      # VMEM [bB, H] f32 scratch (carried over t blocks)
                 *, unroll):
    tb = pl.program_id(1)
    _, bT, _ = xp_ref.shape
    H = whh_ref.shape[0]

    @pl.when(tb == 0)
    def _init():
        h_sc[...] = jnp.zeros_like(h_sc)
        c_sc[...] = jnp.zeros_like(c_sc)
        hl_sc[...] = jnp.zeros_like(hl_sc)

    t_start = tb * bT

    # Skip time blocks that are entirely padding for every sequence in the batch.
    @pl.when(t_start < max_len_ref[0])
    def _recurrence():
        whh = whh_ref[...]
        last_t = len_ref[...] - 1                      # [bB, 1] int32

        def step(s, carry):
            h, c, h_last = carry
            t_abs = t_start + s
            # Input projection precomputed -> only h @ W_hh on the serial chain.
            gates = (xp_ref[:, s, :].astype(jnp.float32)
                     + jnp.dot(h.astype(whh.dtype), whh,
                               preferred_element_type=jnp.float32))   # [bB, 4H]
            sig = jax.nn.sigmoid(gates[:, : 3 * H])    # i|f|o: one contiguous EUP slab
            g_g = jnp.tanh(gates[:, 3 * H:])
            i_g = sig[:, 0 * H: 1 * H]
            f_g = sig[:, 1 * H: 2 * H]
            o_g = sig[:, 2 * H: 3 * H]
            c_new = f_g * c + i_g * g_g
            h_new = o_g * jnp.tanh(c_new)
            # Keep hidden state at t == lengths-1 (== pad_packed + gather).
            h_last = jnp.where(last_t == t_abs, h_new, h_last)
            return h_new, c_new, h_last

        h, c, hl = lax.fori_loop(0, bT, step,
                                 (h_sc[...], c_sc[...], hl_sc[...]),
                                 unroll=unroll)
        h_sc[...] = h
        c_sc[...] = c
        hl_sc[...] = hl

    @pl.when(tb == pl.num_programs(1) - 1)
    def _finalize():
        # Fused fc: Linear + ReLU on the gathered last-valid hidden state.
        y = jnp.dot(hl_sc[...], wfc_ref[...],
                    preferred_element_type=jnp.float32) + bfc_ref[...]
        out_ref[...] = jnp.maximum(y, 0.0)


def lstm_model_forward(x, lengths, params, *, matmul_dtype=jnp.float32,
                       block_b=None, block_t=None):
    """JAX/Pallas equivalent of LSTMModel.forward (num_layers=1).

    Args:
        x:       f32[B, T, input_size] or [B, T] (unsqueezed like the module)
        lengths: int[B] valid lengths (1 <= lengths[b] <= T)
        params:  PyTorch-layout tensors:
                 w_ih [4H, I], w_hh [4H, H], b_ih [4H], b_hh [4H],
                 w_fc [O, H], b_fc [O]
        matmul_dtype: dtype of MXU operands streamed into the recurrence
                 (bf16 recommended on v6e/v7x; carries/elementwise stay f32).
    Returns:
        f32[B, output_size]
    """
    if x.ndim == 2:
        x = x[..., None]
    x = x.astype(jnp.float32)
    B, T, _ = x.shape
    H = params["w_hh"].shape[1]
    O = params["w_fc"].shape[0]
    O_pad = pl.cdiv(O, 128) * 128                      # lane-dense fc output

    # --- one-time parameter-side transforms (trace-time) ---
    w_ih_t = _reorder_gates_last_axis(params["w_ih"].T.astype(jnp.float32))  # [I, 4H]
    w_hh_t = _reorder_gates_last_axis(params["w_hh"].T.astype(jnp.float32))  # [H, 4H]
    bias = _reorder_gates_last_axis(
        (params["b_ih"] + params["b_hh"]).astype(jnp.float32))[None, :]      # [1, 4H]
    w_fc_t = jnp.zeros((H, O_pad), jnp.float32).at[:, :O].set(
        params["w_fc"].T.astype(jnp.float32))
    b_fc = jnp.zeros((1, O_pad), jnp.float32).at[:, :O].set(
        params["b_fc"].astype(jnp.float32))

    # --- hoisted input projection: one big [B*T, I] x [I, 4H] matmul; the
    # streamed tensor is lane-dense (last dim 4H) and stays batch-first
    # (no time-major transpose / HBM round-trip). ---
    xp = (jnp.einsum("bti,ig->btg", x, w_ih_t) + bias).astype(matmul_dtype)  # [B, T, 4H]
    w_hh_mm = w_hh_t.astype(matmul_dtype)

    lens = lengths.reshape(B, 1).astype(jnp.int32)
    max_len = jnp.max(lengths).astype(jnp.int32).reshape(1)

    if block_b is None:
        block_b = B if B <= 128 else 128
    if block_t is None:
        block_t = _pick_block_t(T, matmul_dtype)
    grid = (pl.cdiv(B, block_b), pl.cdiv(T, block_t))
    unroll = min(block_t, 8)                           # cap unroll (vreg pressure)

    H4 = 4 * H
    kernel = functools.partial(_lstm_kernel, unroll=unroll)

    out = pl.pallas_call(
        kernel,
        out_shape=jax.ShapeDtypeStruct((B, O_pad), jnp.float32),
        grid_spec=pltpu.PrefetchScalarGridSpec(
            num_scalar_prefetch=1,                     # max(lengths) -> SMEM
            grid=grid,
            in_specs=[
                pl.BlockSpec((block_b, 1), lambda b, t, ml: (b, 0)),            # lengths
                pl.BlockSpec((block_b, block_t, H4), lambda b, t, ml: (b, t, 0)),  # x@W_ih^T + b
                pl.BlockSpec((H, H4), lambda b, t, ml: (0, 0)),                 # W_hh^T
                pl.BlockSpec((H, O_pad), lambda b, t, ml: (0, 0)),              # W_fc^T (lane-padded)
                pl.BlockSpec((1, O_pad), lambda b, t, ml: (0, 0)),              # b_fc  (lane-padded)
            ],
            out_specs=pl.BlockSpec((block_b, O_pad), lambda b, t, ml: (b, 0)),
            scratch_shapes=[pltpu.VMEM((block_b, H), jnp.float32)] * 3,         # h, c, h_last
        ),
        compiler_params=pltpu.CompilerParams(
            dimension_semantics=("parallel", "arbitrary"),
            vmem_limit_bytes=32 * 1024 * 1024,
        ),
    )(max_len, lens, xp, w_hh_mm, w_fc_t, b_fc)
    return out[:, :O]


def _ref_forward(x, lengths, params):
    """Plain-JAX reference mirroring the PyTorch forward (f32, PyTorch gate order)."""
    if x.ndim == 2:
        x = x[..., None]
    B, T, _ = x.shape
    H = params["w_hh"].shape[1]
    w_ih, w_hh = params["w_ih"], params["w_hh"]
    b = params["b_ih"] + params["b_hh"]
    h = jnp.zeros((B, H), jnp.float32)
    c = jnp.zeros((B, H), jnp.float32)
    h_last = jnp.zeros((B, H), jnp.float32)
    for t in range(T):
        g = x[:, t, :] @ w_ih.T + h @ w_hh.T + b
        i_g = jax.nn.sigmoid(g[:, :H])
        f_g = jax.nn.sigmoid(g[:, H:2 * H])
        g_g = jnp.tanh(g[:, 2 * H:3 * H])
        o_g = jax.nn.sigmoid(g[:, 3 * H:])
        c = f_g * c + i_g * g_g
        h = o_g * jnp.tanh(c)
        h_last = jnp.where((lengths - 1)[:, None] == t, h, h_last)
    y = h_last @ params["w_fc"].T + params["b_fc"]
    return jnp.maximum(y, 0.0)


if __name__ == "__main__":
    B, T, I, H, O = 2, 8, 4, 32, 8

    key = jax.random.PRNGKey(0)
    ks = jax.random.split(key, 8)
    scale = 1.0 / jnp.sqrt(jnp.float32(H))

    params = {
        "w_ih": jax.random.uniform(ks[0], (4 * H, I), jnp.float32, -scale, scale),
        "w_hh": jax.random.uniform(ks[1], (4 * H, H), jnp.float32, -scale, scale),
        "b_ih": jax.random.uniform(ks[2], (4 * H,), jnp.float32, -scale, scale),
        "b_hh": jax.random.uniform(ks[3], (4 * H,), jnp.float32, -scale, scale),
        "w_fc": jax.random.uniform(ks[4], (O, H), jnp.float32, -scale, scale),
        "b_fc": jax.random.uniform(ks[5], (O,), jnp.float32, -scale, scale),
    }

    x = jax.random.normal(ks[6], (B, T, I), dtype=jnp.float32)
    lengths = jax.random.randint(ks[7], (B,), minval=1, maxval=T + 1)

    ref = _ref_forward(x, lengths, params)

    # f32 MXU path — exact match to the PyTorch math.
    out = lstm_model_forward(x, lengths, params)
    out = jax.block_until_ready(out)
    assert out.shape == (B, O), out.shape
    assert jnp.allclose(out, ref, atol=2e-3, rtol=2e-3), (out, ref)

    # bf16 MXU-operand path (rated MXU path on v6e/v7x); f32 carries & elementwise.
    out_bf16 = lstm_model_forward(x, lengths, params, matmul_dtype=jnp.bfloat16)
    out_bf16 = jax.block_until_ready(out_bf16)
    assert jnp.allclose(out_bf16, ref, atol=5e-2, rtol=5e-2), (out_bf16, ref)

    print("KERNEL_OK")
</pallas_src>

<mosaic_0001>
module attributes {stable_mosaic.version = 11 : i64} {
  func.func @_lstm_kernel(%arg0: i32, %arg1: i32, %arg2: memref<1xi32, #tpu.memory_space<smem>>, %arg3: memref<2x1xi32, #tpu.memory_space<vmem>>, %arg4: memref<2x8x128xf32, #tpu.memory_space<vmem>>, %arg5: memref<32x128xf32, #tpu.memory_space<vmem>>, %arg6: memref<32x128xf32, #tpu.memory_space<vmem>>, %arg7: memref<1x128xf32, #tpu.memory_space<vmem>>, %arg8: memref<2x128xf32, #tpu.memory_space<vmem>>, %arg9: memref<2x32xf32, #tpu.memory_space<vmem>>, %arg10: memref<2x32xf32, #tpu.memory_space<vmem>>, %arg11: memref<2x32xf32, #tpu.memory_space<vmem>>) attributes {dimension_semantics = [#tpu.dimension_semantics<parallel>, #tpu.dimension_semantics<arbitrary>], iteration_bounds = array<i64: 1, 1>, scalar_prefetch = 1 : i64, scratch_operands = 3 : i64, tpu.core_type = #tpu.core_type<tc>, window_params = [{transform_indices = @transform_0, window_bounds = array<i64: 2, 1>}, {transform_indices = @transform_1, window_bounds = array<i64: 2, 8, 128>}, {pipeline_mode = #tpu.pipeline_mode<synchronous>, transform_indices = @transform_2, window_bounds = array<i64: 32, 128>}, {pipeline_mode = #tpu.pipeline_mode<synchronous>, transform_indices = @transform_3, window_bounds = array<i64: 32, 128>}, {pipeline_mode = #tpu.pipeline_mode<synchronous>, transform_indices = @transform_4, window_bounds = array<i64: 1, 128>}, {transform_indices = @transform_5, window_bounds = array<i64: 2, 128>}]} {
    %c0_i32 = arith.constant 0 : i32
    %0 = arith.cmpi eq, %arg1, %c0_i32 : i32
    %1 = arith.extui %0 : i1 to i32
    %c0_i32_0 = arith.constant 0 : i32
    %2 = arith.cmpi ne, %1, %c0_i32_0 : i32
    scf.if %2 {
      %cst = arith.constant 0.000000e+00 : f32
      %11 = vector.broadcast %cst : f32 to vector<2x32xf32>
      %c0_4 = arith.constant 0 : index
      %c0_5 = arith.constant 0 : index
      %12 = vector.load %arg9[%c0_4, %c0_5] : memref<2x32xf32, #tpu.memory_space<vmem>>, vector<2x32xf32>
      tpu.vector_store %arg9[%c0_4, %c0_5], %11 {strides = array<i32>} : memref<2x32xf32, #tpu.memory_space<vmem>>, vector<2x32xf32>,
      %cst_6 = arith.constant 0.000000e+00 : f32
      %13 = vector.broadcast %cst_6 : f32 to vector<2x32xf32>
      %c0_7 = arith.constant 0 : index
      %c0_8 = arith.constant 0 : index
      %14 = vector.load %arg10[%c0_7, %c0_8] : memref<2x32xf32, #tpu.memory_space<vmem>>, vector<2x32xf32>
      tpu.vector_store %arg10[%c0_7, %c0_8], %13 {strides = array<i32>} : memref<2x32xf32, #tpu.memory_space<vmem>>, vector<2x32xf32>,
      %cst_9 = arith.constant 0.000000e+00 : f32
      %15 = vector.broadcast %cst_9 : f32 to vector<2x32xf32>
      %c0_10 = arith.constant 0 : index
      %c0_11 = arith.constant 0 : index
      %16 = vector.load %arg11[%c0_10, %c0_11] : memref<2x32xf32, #tpu.memory_space<vmem>>, vector<2x32xf32>
      tpu.vector_store %arg11[%c0_10, %c0_11], %15 {strides = array<i32>} : memref<2x32xf32, #tpu.memory_space<vmem>>, vector<2x32xf32>,
    } else {
    }
    %c8_i32 = arith.constant 8 : i32
    %3 = arith.muli %arg1, %c8_i32 : i32
    %c0 = arith.constant 0 : index
    %4 = memref.load %arg2[%c0] : memref<1xi32, #tpu.memory_space<smem>>
    %5 = arith.cmpi slt, %3, %4 : i32
    %6 = arith.extui %5 : i1 to i32
    %c0_i32_1 = arith.constant 0 : i32
    %7 = arith.cmpi ne, %6, %c0_i32_1 : i32
    scf.if %7 {
      %c0_4 = arith.constant 0 : index
      %c0_5 = arith.constant 0 : index
      %11 = vector.load %arg5[%c0_4, %c0_5] : memref<32x128xf32, #tpu.memory_space<vmem>>, vector<32x128xf32>
      %c0_6 = arith.constant 0 : index
      %c0_7 = arith.constant 0 : index
      %12 = vector.load %arg3[%c0_6, %c0_7] : memref<2x1xi32, #tpu.memory_space<vmem>>, vector<2x1xi32>
      %c1_i32 = arith.constant 1 : i32
      %13 = vector.broadcast %c1_i32 : i32 to vector<2x1xi32>
      %14 = arith.subi %12, %13 : vector<2x1xi32>
      %c0_8 = arith.constant 0 : index
      %c0_9 = arith.constant 0 : index
      %15 = vector.load %arg9[%c0_8, %c0_9] : memref<2x32xf32, #tpu.memory_space<vmem>>, vector<2x32xf32>
      %c0_10 = arith.constant 0 : index
      %c0_11 = arith.constant 0 : index
      %16 = vector.load %arg10[%c0_10, %c0_11] : memref<2x32xf32, #tpu.memory_space<vmem>>, vector<2x32xf32>
      %c0_12 = arith.constant 0 : index
      %c0_13 = arith.constant 0 : index
      %17 = vector.load %arg11[%c0_12, %c0_13] : memref<2x32xf32, #tpu.memory_space<vmem>>, vector<2x32xf32>
      %c0_i32_14 = arith.constant 0 : i32
      %18 = arith.addi %3, %c0_i32_14 : i32
      %c0_15 = arith.constant 0 : index
      %19 = arith.index_cast %c0_i32_14 : i32 to index
      %c0_16 = arith.constant 0 : index
      %20 = vector.load %arg4[%c0_15, %19, %c0_16] : memref<2x8x128xf32, #tpu.memory_space<vmem>>, vector<2x1x128xf32>
      %21 = vector.shape_cast %20 : vector<2x1x128xf32> to vector<2x128xf32>
      %cst = arith.constant dense<0.000000e+00> : vector<2x128xf32>
      %22 = tpu.matmul %15, %11, %cst {dimension_numbers = #tpu.dot_dimension_numbers<[1], [0], [0], [1], [0, 0, 1, 1], [], []>} : vector<2x32xf32>, vector<32x128xf32>, vector<2x128xf32> -> vector<2x128xf32>
      %23 = arith.addf %21, %22 : vector<2x128xf32>
      %24 = vector.extract_strided_slice %23 {offsets = [0, 0], sizes = [2, 96], strides = [1, 1]} : vector<2x128xf32> to vector<2x96xf32>
      %25 = arith.negf %24 : vector<2x96xf32>
      %26 = math.exp %25 : vector<2x96xf32>
      %cst_17 = arith.constant 1.000000e+00 : f32
      %27 = vector.broadcast %cst_17 : f32 to vector<2x96xf32>
      %28 = arith.addf %27, %26 : vector<2x96xf32>
      %29 = arith.divf %27, %28 : vector<2x96xf32>
      %30 = vector.extract_strided_slice %23 {offsets = [0, 96], sizes = [2, 32], strides = [1, 1]} : vector<2x128xf32> to vector<2x32xf32>
      %31 = math.tanh %30 : vector<2x32xf32>
      %32 = vector.extract_strided_slice %29 {offsets = [0, 0], sizes = [2, 32], strides = [1, 1]} : vector<2x96xf32> to vector<2x32xf32>
      %33 = vector.extract_strided_slice %29 {offsets = [0, 32], sizes = [2, 32], strides = [1, 1]} : vector<2x96xf32> to vector<2x32xf32>
      %34 = vector.extract_strided_slice %29 {offsets = [0, 64], sizes = [2, 32], strides = [1, 1]} : vector<2x96xf32> to vector<2x32xf32>
      %35 = arith.mulf %33, %16 : vector<2x32xf32>
      %36 = arith.mulf %32, %31 : vector<2x32xf32>
      %37 = arith.addf %35, %36 : vector<2x32xf32>
      %38 = math.tanh %37 : vector<2x32xf32>
      %39 = arith.mulf %34, %38 : vector<2x32xf32>
      %40 = vector.broadcast %18 : i32 to vector<2x1xi32>
      %41 = arith.cmpi eq, %14, %40 : vector<2x1xi32>
      %42 = vector.shape_cast %41 : vector<2x1xi1> to vector<2x1xi1>
      %43 = vector.broadcast %42 : vector<2x1xi1> to vector<2x32xi1>
      %44 = arith.select %43, %39, %17 : vector<2x32xi1>, vector<2x32xf32>
      %c1_i32_18 = arith.constant 1 : i32
      %45 = arith.addi %3, %c1_i32_18 : i32
      %c0_19 = arith.constant 0 : index
      %46 = arith.index_cast %c1_i32_18 : i32 to index
      %c0_20 = arith.constant 0 : index
      %47 = vector.load %arg4[%c0_19, %46, %c0_20] : memref<2x8x128xf32, #tpu.memory_space<vmem>>, vector<2x1x128xf32>
      %48 = vector.shape_cast %47 : vector<2x1x128xf32> to vector<2x128xf32>
      %cst_21 = arith.constant dense<0.000000e+00> : vector<2x128xf32>
      %49 = tpu.matmul %39, %11, %cst_21 {dimension_numbers = #tpu.dot_dimension_numbers<[1], [0], [0], [1], [0, 0, 1, 1], [], []>} : vector<2x32xf32>, vector<32x128xf32>, vector<2x128xf32> -> vector<2x128xf32>
      %50 = arith.addf %48, %49 : vector<2x128xf32>
      %51 = vector.extract_strided_slice %50 {offsets = [0, 0], sizes = [2, 96], strides = [1, 1]} : vector<2x128xf32> to vector<2x96xf32>
      %52 = arith.negf %51 : vector<2x96xf32>
      %53 = math.exp %52 : vector<2x96xf32>
      %cst_22 = arith.constant 1.000000e+00 : f32
      %54 = vector.broadcast %cst_22 : f32 to vector<2x96xf32>
      %55 = arith.addf %54, %53 : vector<2x96xf32>
      %56 = arith.divf %54, %55 : vector<2x96xf32>
      %57 = vector.extract_strided_slice %50 {offsets = [0, 96], sizes = [2, 32], strides = [1, 1]} : vector<2x128xf32> to vector<2x32xf32>
      %58 = math.tanh %57 : vector<2x32xf32>
      %59 = vector.extract_strided_slice %56 {offsets = [0, 0], sizes = [2, 32], strides = [1, 1]} : vector<2x96xf32> to vector<2x32xf32>
      %60 = vector.extract_strided_slice %56 {offsets = [0, 32], sizes = [2, 32], strides = [1, 1]} : vector<2x96xf32> to vector<2x32xf32>
      %61 = vector.extract_strided_slice %56 {offsets = [0, 64], sizes = [2, 32], strides = [1, 1]} : vector<2x96xf32> to vector<2x32xf32>
      %62 = arith.mulf %60, %37 : vector<2x32xf32>
      %63 = arith.mulf %59, %58 : vector<2x32xf32>
      %64 = arith.addf %62, %63 : vector<2x32xf32>
      %65 = math.tanh %64 : vector<2x32xf32>
      %66 = arith.mulf %61, %65 : vector<2x32xf32>
      %67 = vector.broadcast %45 : i32 to vector<2x1xi32>
      %68 = arith.cmpi eq, %14, %67 : vector<2x1xi32>
      %69 = vector.shape_cast %68 : vector<2x1xi1> to vector<2x1xi1>
      %70 = vector.broadcast %69 : vector<2x1xi1> to vector<2x32xi1>
      %71 = arith.select %70, %66, %44 : vector<2x32xi1>, vector<2x32xf32>
      %c2_i32 = arith.constant 2 : i32
      %72 = arith.addi %3, %c2_i32 : i32
      %c0_23 = arith.constant 0 : index
      %73 = arith.index_cast %c2_i32 : i32 to index
      %c0_24 = arith.constant 0 : index
      %74 = vector.load %arg4[%c0_23, %73, %c0_24] : memref<2x8x128xf32, #tpu.memory_space<vmem>>, vector<2x1x128xf32>
      %75 = vector.shape_cast %74 : vector<2x1x128xf32> to vector<2x128xf32>
      %cst_25 = arith.constant dense<0.000000e+00> : vector<2x128xf32>
      %76 = tpu.matmul %66, %11, %cst_25 {dimension_numbers = #tpu.dot_dimension_numbers<[1], [0], [0], [1], [0, 0, 1, 1], [], []>} : vector<2x32xf32>, vector<32x128xf32>, vector<2x128xf32> -> vector<2x128xf32>
      %77 = arith.addf %75, %76 : vector<2x128xf32>
      %78 = vector.extract_strided_slice %77 {offsets = [0, 0], sizes = [2, 96], strides = [1, 1]} : vector<2x128xf32> to vector<2x96xf32>
      %79 = arith.negf %78 : vector<2x96xf32>
      %80 = math.exp %79 : vector<2x96xf32>
      %cst_26 = arith.constant 1.000000e+00 : f32
      %81 = vector.broadcast %cst_26 : f32 to vector<2x96xf32>
      %82 = arith.addf %81, %80 : vector<2x96xf32>
      %83 = arith.divf %81, %82 : vector<2x96xf32>
      %84 = vector.extract_strided_slice %77 {offsets = [0, 96], sizes = [2, 32], strides = [1, 1]} : vector<2x128xf32> to vector<2x32xf32>
      %85 = math.tanh %84 : vector<2x32xf32>
      %86 = vector.extract_strided_slice %83 {offsets = [0, 0], sizes = [2, 32], strides = [1, 1]} : vector<2x96xf32> to vector<2x32xf32>
      %87 = vector.extract_strided_slice %83 {offsets = [0, 32], sizes = [2, 32], strides = [1, 1]} : vector<2x96xf32> to vector<2x32xf32>
      %88 = vector.extract_strided_slice %83 {offsets = [0, 64], sizes = [2, 32], strides = [1, 1]} : vector<2x96xf32> to vector<2x32xf32>
      %89 = arith.mulf %87, %64 : vector<2x32xf32>
      %90 = arith.mulf %86, %85 : vector<2x32xf32>
      %91 = arith.addf %89, %90 : vector<2x32xf32>
      %92 = math.tanh %91 : vector<2x32xf32>
      %93 = arith.mulf %88, %92 : vector<2x32xf32>
      %94 = vector.broadcast %72 : i32 to vector<2x1xi32>
      %95 = arith.cmpi eq, %14, %94 : vector<2x1xi32>
      %96 = vector.shape_cast %95 : vector<2x1xi1> to vector<2x1xi1>
      %97 = vector.broadcast %96 : vector<2x1xi1> to vector<2x32xi1>
      %98 = arith.select %97, %93, %71 : vector<2x32xi1>, vector<2x32xf32>
      %c3_i32 = arith.constant 3 : i32
      %99 = arith.addi %3, %c3_i32 : i32
      %c0_27 = arith.constant 0 : index
      %100 = arith.index_cast %c3_i32 : i32 to index
      %c0_28 = arith.constant 0 : index
      %101 = vector.load %arg4[%c0_27, %100, %c0_28] : memref<2x8x128xf32, #tpu.memory_space<vmem>>, vector<2x1x128xf32>
      %102 = vector.shape_cast %101 : vector<2x1x128xf32> to vector<2x128xf32>
      %cst_29 = arith.constant dense<0.000000e+00> : vector<2x128xf32>
      %103 = tpu.matmul %93, %11, %cst_29 {dimension_numbers = #tpu.dot_dimension_numbers<[1], [0], [0], [1], [0, 0, 1, 1], [], []>} : vector<2x32xf32>, vector<32x128xf32>, vector<2x128xf32> -> vector<2x128xf32>
      %104 = arith.addf %102, %103 : vector<2x128xf32>
      %105 = vector.extract_strided_slice %104 {offsets = [0, 0], sizes = [2, 96], strides = [1, 1]} : vector<2x128xf32> to vector<2x96xf32>
      %106 = arith.negf %105 : vector<2x96xf32>
      %107 = math.exp %106 : vector<2x96xf32>
      %cst_30 = arith.constant 1.000000e+00 : f32
      %108 = vector.broadcast %cst_30 : f32 to vector<2x96xf32>
      %109 = arith.addf %108, %107 : vector<2x96xf32>
      %110 = arith.divf %108, %109 : vector<2x96xf32>
      %111 = vector.extract_strided_slice %104 {offsets = [0, 96], sizes = [2, 32], strides = [1, 1]} : vector<2x128xf32> to vector<2x32xf32>
      %112 = math.tanh %111 : vector<2x32xf32>
      %113 = vector.extract_strided_slice %110 {offsets = [0, 0], sizes = [2, 32], strides = [1, 1]} : vector<2x96xf32> to vector<2x32xf32>
      %114 = vector.extract_strided_slice %110 {offsets = [0, 32], sizes = [2, 32], strides = [1, 1]} : vector<2x96xf32> to vector<2x32xf32>
      %115 = vector.extract_strided_slice %110 {offsets = [0, 64], sizes = [2, 32], strides = [1, 1]} : vector<2x96xf32> to vector<2x32xf32>
      %116 = arith.mulf %114, %91 : vector<2x32xf32>
      %117 = arith.mulf %113, %112 : vector<2x32xf32>
      %118 = arith.addf %116, %117 : vector<2x32xf32>
      %119 = math.tanh %118 : vector<2x32xf32>
      %120 = arith.mulf %115, %119 : vector<2x32xf32>
      %121 = vector.broadcast %99 : i32 to vector<2x1xi32>
      %122 = arith.cmpi eq, %14, %121 : vector<2x1xi32>
      %123 = vector.shape_cast %122 : vector<2x1xi1> to vector<2x1xi1>
      %124 = vector.broadcast %123 : vector<2x1xi1> to vector<2x32xi1>
      %125 = arith.select %124, %120, %98 : vector<2x32xi1>, vector<2x32xf32>
      %c4_i32 = arith.constant 4 : i32
      %126 = arith.addi %3, %c4_i32 : i32
      %c0_31 = arith.constant 0 : index
      %127 = arith.index_cast %c4_i32 : i32 to index
      %c0_32 = arith.constant 0 : index
      %128 = vector.load %arg4[%c0_31, %127, %c0_32] : memref<2x8x128xf32, #tpu.memory_space<vmem>>, vector<2x1x128xf32>
      %129 = vector.shape_cast %128 : vector<2x1x128xf32> to vector<2x128xf32>
      %cst_33 = arith.constant dense<0.000000e+00> : vector<2x128xf32>
      %130 = tpu.matmul %120, %11, %cst_33 {dimension_numbers = #tpu.dot_dimension_numbers<[1], [0], [0], [1], [0, 0, 1, 1], [], []>} : vector<2x32xf32>, vector<32x128xf32>, vector<2x128xf32> -> vector<2x128xf32>
      %131 = arith.addf %129, %130 : vector<2x128xf32>
      %132 = vector.extract_strided_slice %131 {offsets = [0, 0], sizes = [2, 96], strides = [1, 1]} : vector<2x128xf32> to vector<2x96xf32>
      %133 = arith.negf %132 : vector<2x96xf32>
      %134 = math.exp %133 : vector<2x96xf32>
      %cst_34 = arith.constant 1.000000e+00 : f32
      %135 = vector.broadcast %cst_34 : f32 to vector<2x96xf32>
      %136 = arith.addf %135, %134 : vector<2x96xf32>
      %137 = arith.divf %135, %136 : vector<2x96xf32>
      %138 = vector.extract_strided_slice %131 {offsets = [0, 96], sizes = [2, 32], strides = [1, 1]} : vector<2x128xf32> to vector<2x32xf32>
      %139 = math.tanh %138 : vector<2x32xf32>
      %140 = vector.extract_strided_slice %137 {offsets = [0, 0], sizes = [2, 32], strides = [1, 1]} : vector<2x96xf32> to vector<2x32xf32>
      %141 = vector.extract_strided_slice %137 {offsets = [0, 32], sizes = [2, 32], strides = [1, 1]} : vector<2x96xf32> to vector<2x32xf32>
      %142 = vector.extract_strided_slice %137 {offsets = [0, 64], sizes = [2, 32], strides = [1, 1]} : vector<2x96xf32> to vector<2x32xf32>
      %143 = arith.mulf %141, %118 : vector<2x32xf32>
      %144 = arith.mulf %140, %139 : vector<2x32xf32>
      %145 = arith.addf %143, %144 : vector<2x32xf32>
      %146 = math.tanh %145 : vector<2x32xf32>
      %147 = arith.mulf %142, %146 : vector<2x32xf32>
      %148 = vector.broadcast %126 : i32 to vector<2x1xi32>
      %149 = arith.cmpi eq, %14, %148 : vector<2x1xi32>
      %150 = vector.shape_cast %149 : vector<2x1xi1> to vector<2x1xi1>
      %151 = vector.broadcast %150 : vector<2x1xi1> to vector<2x32xi1>
      %152 = arith.select %151, %147, %125 : vector<2x32xi1>, vector<2x32xf32>
      %c5_i32 = arith.constant 5 : i32
      %153 = arith.addi %3, %c5_i32 : i32
      %c0_35 = arith.constant 0 : index
      %154 = arith.index_cast %c5_i32 : i32 to index
      %c0_36 = arith.constant 0 : index
      %155 = vector.load %arg4[%c0_35, %154, %c0_36] : memref<2x8x128xf32, #tpu.memory_space<vmem>>, vector<2x1x128xf32>
      %156 = vector.shape_cast %155 : vector<2x1x128xf32> to vector<2x128xf32>
      %cst_37 = arith.constant dense<0.000000e+00> : vector<2x128xf32>
      %157 = tpu.matmul %147, %11, %cst_37 {dimension_numbers = #tpu.dot_dimension_numbers<[1], [0], [0], [1], [0, 0, 1, 1], [], []>} : vector<2x32xf32>, vector<32x128xf32>, vector<2x128xf32> -> vector<2x128xf32>
      %158 = arith.addf %156, %157 : vector<2x128xf32>
      %159 = vector.extract_strided_slice %158 {offsets = [0, 0], sizes = [2, 96], strides = [1, 1]} : vector<2x128xf32> to vector<2x96xf32>
      %160 = arith.negf %159 : vector<2x96xf32>
      %161 = math.exp %160 : vector<2x96xf32>
      %cst_38 = arith.constant 1.000000e+00 : f32
      %162 = vector.broadcast %cst_38 : f32 to vector<2x96xf32>
      %163 = arith.addf %162, %161 : vector<2x96xf32>
      %164 = arith.divf %162, %163 : vector<2x96xf32>
      %165 = vector.extract_strided_slice %158 {offsets = [0, 96], sizes = [2, 32], strides = [1, 1]} : vector<2x128xf32> to vector<2x32xf32>
      %166 = math.tanh %165 : vector<2x32xf32>
      %167 = vector.extract_strided_slice %164 {offsets = [0, 0], sizes = [2, 32], strides = [1, 1]} : vector<2x96xf32> to vector<2x32xf32>
      %168 = vector.extract_strided_slice %164 {offsets = [0, 32], sizes = [2, 32], strides = [1, 1]} : vector<2x96xf32> to vector<2x32xf32>
      %169 = vector.extract_strided_slice %164 {offsets = [0, 64], sizes = [2, 32], strides = [1, 1]} : vector<2x96xf32> to vector<2x32xf32>
      %170 = arith.mulf %168, %145 : vector<2x32xf32>
      %171 = arith.mulf %167, %166 : vector<2x32xf32>
      %172 = arith.addf %170, %171 : vector<2x32xf32>
      %173 = math.tanh %172 : vector<2x32xf32>
      %174 = arith.mulf %169, %173 : vector<2x32xf32>
      %175 = vector.broadcast %153 : i32 to vector<2x1xi32>
      %176 = arith.cmpi eq, %14, %175 : vector<2x1xi32>
      %177 = vector.shape_cast %176 : vector<2x1xi1> to vector<2x1xi1>
      %178 = vector.broadcast %177 : vector<2x1xi1> to vector<2x32xi1>
      %179 = arith.select %178, %174, %152 : vector<2x32xi1>, vector<2x32xf32>
      %c6_i32 = arith.constant 6 : i32
      %180 = arith.addi %3, %c6_i32 : i32
      %c0_39 = arith.constant 0 : index
      %181 = arith.index_cast %c6_i32 : i32 to index
      %c0_40 = arith.constant 0 : index
      %182 = vector.load %arg4[%c0_39, %181, %c0_40] : memref<2x8x128xf32, #tpu.memory_space<vmem>>, vector<2x1x128xf32>
      %183 = vector.shape_cast %182 : vector<2x1x128xf32> to vector<2x128xf32>
      %cst_41 = arith.constant dense<0.000000e+00> : vector<2x128xf32>
      %184 = tpu.matmul %174, %11, %cst_41 {dimension_numbers = #tpu.dot_dimension_numbers<[1], [0], [0], [1], [0, 0, 1, 1], [], []>} : vector<2x32xf32>, vector<32x128xf32>, vector<2x128xf32> -> vector<2x128xf32>
      %185 = arith.addf %183, %184 : vector<2x128xf32>
      %186 = vector.extract_strided_slice %185 {offsets = [0, 0], sizes = [2, 96], strides = [1, 1]} : vector<2x128xf32> to vector<2x96xf32>
      %187 = arith.negf %186 : vector<2x96xf32>
      %188 = math.exp %187 : vector<2x96xf32>
      %cst_42 = arith.constant 1.000000e+00 : f32
      %189 = vector.broadcast %cst_42 : f32 to vector<2x96xf32>
      %190 = arith.addf %189, %188 : vector<2x96xf32>
      %191 = arith.divf %189, %190 : vector<2x96xf32>
      %192 = vector.extract_strided_slice %185 {offsets = [0, 96], sizes = [2, 32], strides = [1, 1]} : vector<2x128xf32> to vector<2x32xf32>
      %193 = math.tanh %192 : vector<2x32xf32>
      %194 = vector.extract_strided_slice %191 {offsets = [0, 0], sizes = [2, 32], strides = [1, 1]} : vector<2x96xf32> to vector<2x32xf32>
      %195 = vector.extract_strided_slice %191 {offsets = [0, 32], sizes = [2, 32], strides = [1, 1]} : vector<2x96xf32> to vector<2x32xf32>
      %196 = vector.extract_strided_slice %191 {offsets = [0, 64], sizes = [2, 32], strides = [1, 1]} : vector<2x96xf32> to vector<2x32xf32>
      %197 = arith.mulf %195, %172 : vector<2x32xf32>
      %198 = arith.mulf %194, %193 : vector<2x32xf32>
      %199 = arith.addf %197, %198 : vector<2x32xf32>
      %200 = math.tanh %199 : vector<2x32xf32>
      %201 = arith.mulf %196, %200 : vector<2x32xf32>
      %202 = vector.broadcast %180 : i32 to vector<2x1xi32>
      %203 = arith.cmpi eq, %14, %202 : vector<2x1xi32>
      %204 = vector.shape_cast %203 : vector<2x1xi1> to vector<2x1xi1>
      %205 = vector.broadcast %204 : vector<2x1xi1> to vector<2x32xi1>
      %206 = arith.select %205, %201, %179 : vector<2x32xi1>, vector<2x32xf32>
      %c7_i32 = arith.constant 7 : i32
      %207 = arith.addi %3, %c7_i32 : i32
      %c0_43 = arith.constant 0 : index
      %208 = arith.index_cast %c7_i32 : i32 to index
      %c0_44 = arith.constant 0 : index
      %209 = vector.load %arg4[%c0_43, %208, %c0_44] : memref<2x8x128xf32, #tpu.memory_space<vmem>>, vector<2x1x128xf32>
      %210 = vector.shape_cast %209 : vector<2x1x128xf32> to vector<2x128xf32>
      %cst_45 = arith.constant dense<0.000000e+00> : vector<2x128xf32>
      %211 = tpu.matmul %201, %11, %cst_45 {dimension_numbers = #tpu.dot_dimension_numbers<[1], [0], [0], [1], [0, 0, 1, 1], [], []>} : vector<2x32xf32>, vector<32x128xf32>, vector<2x128xf32> -> vector<2x128xf32>
      %212 = arith.addf %210, %211 : vector<2x128xf32>
      %213 = vector.extract_strided_slice %212 {offsets = [0, 0], sizes = [2, 96], strides = [1, 1]} : vector<2x128xf32> to vector<2x96xf32>
      %214 = arith.negf %213 : vector<2x96xf32>
      %215 = math.exp %214 : vector<2x96xf32>
      %cst_46 = arith.constant 1.000000e+00 : f32
      %216 = vector.broadcast %cst_46 : f32 to vector<2x96xf32>
      %217 = arith.addf %216, %215 : vector<2x96xf32>
      %218 = arith.divf %216, %217 : vector<2x96xf32>
      %219 = vector.extract_strided_slice %212 {offsets = [0, 96], sizes = [2, 32], strides = [1, 1]} : vector<2x128xf32> to vector<2x32xf32>
      %220 = math.tanh %219 : vector<2x32xf32>
      %221 = vector.extract_strided_slice %218 {offsets = [0, 0], sizes = [2, 32], strides = [1, 1]} : vector<2x96xf32> to vector<2x32xf32>
      %222 = vector.extract_strided_slice %218 {offsets = [0, 32], sizes = [2, 32], strides = [1, 1]} : vector<2x96xf32> to vector<2x32xf32>
      %223 = vector.extract_strided_slice %218 {offsets = [0, 64], sizes = [2, 32], strides = [1, 1]} : vector<2x96xf32> to vector<2x32xf32>
      %224 = arith.mulf %222, %199 : vector<2x32xf32>
      %225 = arith.mulf %221, %220 : vector<2x32xf32>
      %226 = arith.addf %224, %225 : vector<2x32xf32>
      %227 = math.tanh %226 : vector<2x32xf32>
      %228 = arith.mulf %223, %227 : vector<2x32xf32>
      %229 = vector.broadcast %207 : i32 to vector<2x1xi32>
      %230 = arith.cmpi eq, %14, %229 : vector<2x1xi32>
      %231 = vector.shape_cast %230 : vector<2x1xi1> to vector<2x1xi1>
      %232 = vector.broadcast %231 : vector<2x1xi1> to vector<2x32xi1>
      %233 = arith.select %232, %228, %206 : vector<2x32xi1>, vector<2x32xf32>
      %c8_i32_47 = arith.constant 8 : i32
      %c0_48 = arith.constant 0 : index
      %c0_49 = arith.constant 0 : index
      %234 = vector.load %arg9[%c0_48, %c0_49] : memref<2x32xf32, #tpu.memory_space<vmem>>, vector<2x32xf32>
      tpu.vector_store %arg9[%c0_48, %c0_49], %228 {strides = array<i32>} : memref<2x32xf32, #tpu.memory_space<vmem>>, vector<2x32xf32>,
      %c0_50 = arith.constant 0 : index
      %c0_51 = arith.constant 0 : index
      %235 = vector.load %arg10[%c0_50, %c0_51] : memref<2x32xf32, #tpu.memory_space<vmem>>, vector<2x32xf32>
      tpu.vector_store %arg10[%c0_50, %c0_51], %226 {strides = array<i32>} : memref<2x32xf32, #tpu.memory_space<vmem>>, vector<2x32xf32>,
      %c0_52 = arith.constant 0 : index
      %c0_53 = arith.constant 0 : index
      %236 = vector.load %arg11[%c0_52, %c0_53] : memref<2x32xf32, #tpu.memory_space<vmem>>, vector<2x32xf32>
      tpu.vector_store %arg11[%c0_52, %c0_53], %233 {strides = array<i32>} : memref<2x32xf32, #tpu.memory_space<vmem>>, vector<2x32xf32>,
    } else {
    }
    %c0_i32_2 = arith.constant 0 : i32
    %8 = arith.cmpi eq, %arg1, %c0_i32_2 : i32
    %9 = arith.extui %8 : i1 to i32
    %c0_i32_3 = arith.constant 0 : i32
    %10 = arith.cmpi ne, %9, %c0_i32_3 : i32
    scf.if %10 {
      %c0_4 = arith.constant 0 : index
      %c0_5 = arith.constant 0 : index
      %11 = vector.load %arg11[%c0_4, %c0_5] : memref<2x32xf32, #tpu.memory_space<vmem>>, vector<2x32xf32>
      %c0_6 = arith.constant 0 : index
      %c0_7 = arith.constant 0 : index
      %12 = vector.load %arg6[%c0_6, %c0_7] : memref<32x128xf32, #tpu.memory_space<vmem>>, vector<32x128xf32>
      %cst = arith.constant dense<0.000000e+00> : vector<2x128xf32>
      %13 = tpu.matmul %11, %12, %cst {dimension_numbers = #tpu.dot_dimension_numbers<[1], [0], [0], [1], [0, 0, 1, 1], [], []>} : vector<2x32xf32>, vector<32x128xf32>, vector<2x128xf32> -> vector<2x128xf32>
      %c0_8 = arith.constant 0 : index
      %c0_9 = arith.constant 0 : index
      %14 = vector.load %arg7[%c0_8, %c0_9] : memref<1x128xf32, #tpu.memory_space<vmem>>, vector<1x128xf32>
      %15 = vector.broadcast %14 : vector<1x128xf32> to vector<2x128xf32>
      %16 = arith.addf %13, %15 : vector<2x128xf32>
      %cst_10 = arith.constant 0.000000e+00 : f32
      %17 = vector.broadcast %cst_10 : f32 to vector<2x128xf32>
      %18 = arith.maximumf %16, %17 : vector<2x128xf32>
      %c0_11 = arith.constant 0 : index
      %c0_12 = arith.constant 0 : index
      %19 = vector.load %arg8[%c0_11, %c0_12] : memref<2x128xf32, #tpu.memory_space<vmem>>, vector<2x128xf32>
      tpu.vector_store %arg8[%c0_11, %c0_12], %18 {strides = array<i32>} : memref<2x128xf32, #tpu.memory_space<vmem>>, vector<2x128xf32>,
    } else {
    }
    return
  }
  func.func @transform_0(%arg0: i32, %arg1: i32, %arg2: memref<1xi32, #tpu.memory_space<smem>>) -> (i32, i32) {
    %c0_i32 = arith.constant 0 : i32
    %c0_i32_0 = arith.constant 0 : i32
    return %arg0, %c0_i32 : i32, i32
  }
  func.func @transform_1(%arg0: i32, %arg1: i32, %arg2: memref<1xi32, #tpu.memory_space<smem>>) -> (i32, i32, i32) {
    %c0_i32 = arith.constant 0 : i32
    %c0_i32_0 = arith.constant 0 : i32
    return %arg0, %arg1, %c0_i32 : i32, i32, i32
  }
  func.func @transform_2(%arg0: i32, %arg1: i32, %arg2: memref<1xi32, #tpu.memory_space<smem>>) -> (i32, i32) {
    %c0_i32 = arith.constant 0 : i32
    %c0_i32_0 = arith.constant 0 : i32
    %c0_i32_1 = arith.constant 0 : i32
    return %c0_i32, %c0_i32_0 : i32, i32
  }
  func.func @transform_3(%arg0: i32, %arg1: i32, %arg2: memref<1xi32, #tpu.memory_space<smem>>) -> (i32, i32) {
    %c0_i32 = arith.constant 0 : i32
    %c0_i32_0 = arith.constant 0 : i32
    %c0_i32_1 = arith.constant 0 : i32
    return %c0_i32, %c0_i32_0 : i32, i32
  }
  func.func @transform_4(%arg0: i32, %arg1: i32, %arg2: memref<1xi32, #tpu.memory_space<smem>>) -> (i32, i32) {
    %c0_i32 = arith.constant 0 : i32
    %c0_i32_0 = arith.constant 0 : i32
    %c0_i32_1 = arith.constant 0 : i32
    return %c0_i32, %c0_i32_0 : i32, i32
  }
  func.func @transform_5(%arg0: i32, %arg1: i32, %arg2: memref<1xi32, #tpu.memory_space<smem>>) -> (i32, i32) {
    %c0_i32 = arith.constant 0 : i32
    %c0_i32_0 = arith.constant 0 : i32
    return %arg0, %c0_i32 : i32, i32
  }
}

</mosaic_0001>

<llo_original>
// kernel: tpu_custom_call.1
$region0: #{tpu_custom_call.1}
  #allocation0 [shape = 'u32[]', space=smem, size = 0x4, offset = 0x4, fixed_abs, tag = 'smem constant byte address 0x4 - core index']
  #allocation1 [shape = 'u32[144,128]{1,0:T(1,128)}', space=vmem, size = 0x12000, scoped, tag = 'internal scratch']
  #allocation2 [shape = 'f32[2,32]{1,0:T(2,128)}', space=vmem, size = 0x400, scoped, tag = 'scratch operand']
  #allocation3 [shape = 'f32[2,32]{1,0:T(2,128)}', space=vmem, size = 0x400, scoped, tag = 'scratch operand']
  #allocation4 [shape = 'f32[2,32]{1,0:T(2,128)}', space=vmem, size = 0x400, scoped, tag = 'scratch operand']
  #allocation5 [shape = 's32[1]{0}', space=sflag, size = 0x4, scoped, tag = 'scoped memory for tpu_custom_call.1']
  #allocation6 [shape = 's32[1]{0:T(128)S(6)}', space=smem, size = 0x200, scoped, tag = 'prefetched SMEM operand 0']
  %s0 = inlined_call_operand.<no memory space> [shape: s32[1], index: 0, kind: input, shape index: {}]
  %s1 = inlined_call_operand.vmem [shape: s32[2,1], index: 1, kind: input, shape index: {}]
  %s2 = inlined_call_operand.hbm [shape: f32[2,8,128], index: 2, kind: input, shape index: {}]
  %s3 = inlined_call_operand.hbm [shape: f32[32,128], index: 3, kind: input, shape index: {}]
  %s4 = inlined_call_operand.hbm [shape: f32[32,128], index: 4, kind: input, shape index: {}]
  %s5 = inlined_call_operand.vmem [shape: f32[1,128], index: 5, kind: input, shape index: {}]
  %s6 = inlined_call_operand.hbm [shape: f32[2,128], index: 6, kind: output, shape index: {}]
  %s7 = sld [smem:[#allocation0]]
  $region54: #{tpu_custom_call.1} parent=0
    _
  %s9 = ssub.s32 1, %s7
  %s10 = scalar_select 0, %s9, %s7
  %11 = sst [smem:[#allocation6]] %s0
  $region1: #{tpu_custom_call.1} parent=0
    #allocation7 [shape = 'u8[8192]{0}', space=vmem, size = 0x2000, scoped, tag = 'input window, operand 2, single buffered']
    #allocation8 [shape = 's32[1]{0}', space=sflag, size = 0x4, scoped, tag = 'scoped memory for tpu_custom_call.1']
    #allocation9 [shape = 's32[1]{0}', space=sflag, size = 0x4, scoped, tag = 'scoped memory for tpu_custom_call.1']
    #allocation10 [shape = 'u8[16384]{0}', space=vmem, size = 0x4000, scoped, tag = 'input window, operand 3, single buffered']
    #allocation11 [shape = 's32[1]{0}', space=sflag, size = 0x4, scoped, tag = 'scoped memory for tpu_custom_call.1']
    #allocation12 [shape = 'u8[16384]{0}', space=vmem, size = 0x4000, scoped, tag = 'input window, operand 4, single buffered']
    #allocation13 [shape = 'u8[1024]{0}', space=vmem, size = 0x400, scoped, tag = 'output window, operand 0, single buffered']
    %12 = vsyncpa [#allocation8], 0
    %13 = vsyncpa [#allocation11], 0
    %14 = vsyncpa [#allocation9], 0
    // Predicated region
    $region2: #{tpu_custom_call.1} parent=1 // pred_check
      _
    $region3: #{tpu_custom_call.1} parent=1 // pred_check_branch
      %16 = sbr.rel (0) target = $region5
    $region4: #{tpu_custom_call.1} parent=1 // pred_region
      _
    $region5: #{tpu_custom_call.1} parent=1 // pred_fallthru
      _
    // Predicated region
    $region6: #{tpu_custom_call.1} parent=1 // pred_check
      _
    $region7: #{tpu_custom_call.1} parent=1 // pred_check_branch
      %18 = sbr.rel (0) target = $region9
    $region8: #{tpu_custom_call.1} parent=1 // pred_region
      %s20 = ssub.s32 256, 256
      %21 = vsyncadd [#allocation8], %s20
      %s22 = sshll.u32 [#allocation7], 4
      %s23 = int_to_ptr.vmem [resolvable:$true] %s22
      %28 = dma.hbm_to_vmem [thread:$0]  %s2, 256, %s23, [#allocation8], 128, 128, 8
    $region9: #{tpu_custom_call.1} parent=1 // pred_fallthru
      _
    // Predicated region
    $region10: #{tpu_custom_call.1} parent=1 // pred_check
      _
    $region11: #{tpu_custom_call.1} parent=1 // pred_check_branch
      %30 = sbr.rel (0) target = $region13
    $region12: #{tpu_custom_call.1} parent=1 // pred_region
      %s32 = ssub.s32 512, 512
      %33 = vsyncadd [#allocation11], %s32
      %s34 = sshll.u32 [#allocation10], 4
      %s35 = int_to_ptr.vmem [resolvable:$true] %s34
      %40 = dma.hbm_to_vmem [thread:$0]  %s3, 512, %s35, [#allocation11], 128, 128, 8
    $region13: #{tpu_custom_call.1} parent=1 // pred_fallthru
      _
    // Predicated region
    $region14: #{tpu_custom_call.1} parent=1 // pred_check
      _
    $region15: #{tpu_custom_call.1} parent=1 // pred_check_branch
      %42 = sbr.rel (0) target = $region17
    $region16: #{tpu_custom_call.1} parent=1 // pred_region
      %s44 = ssub.s32 512, 512
      %45 = vsyncadd [#allocation11], %s44
      %s46 = sshll.u32 [#allocation12], 4
      %s47 = int_to_ptr.vmem [resolvable:$true] %s46
      %52 = dma.hbm_to_vmem [thread:$0]  %s4, 512, %s47, [#allocation11], 128, 128, 8
    $region17: #{tpu_custom_call.1} parent=1 // pred_fallthru
      _
    // Predicated region
    $region18: #{tpu_custom_call.1} parent=1 // pred_check
      _
    $region19: #{tpu_custom_call.1} parent=1 // pred_check_branch
      %54 = sbr.rel (0) target = $region21
    $region20: #{tpu_custom_call.1} parent=1 // pred_region
      _
    $region21: #{tpu_custom_call.1} parent=1 // pred_fallthru
      _
    // Predicated region
    $region22: #{tpu_custom_call.1} parent=1 // pred_check
      _
    $region23: #{tpu_custom_call.1} parent=1 // pred_check_branch
      %56 = sbr.rel (0) target = $region25
    $region24: #{tpu_custom_call.1} parent=1 // pred_region
      %57 = dma.done [#allocation8], 256
    $region25: #{tpu_custom_call.1} parent=1 // pred_fallthru
      _
    // Predicated region
    $region26: #{tpu_custom_call.1} parent=1 // pred_check
      _
    $region27: #{tpu_custom_call.1} parent=1 // pred_check_branch
      %59 = sbr.rel (0) target = $region29
    $region28: #{tpu_custom_call.1} parent=1 // pred_region
      %60 = dma.done [#allocation11], 512
    $region29: #{tpu_custom_call.1} parent=1 // pred_fallthru
      _
    // Predicated region
    $region30: #{tpu_custom_call.1} parent=1 // pred_check
      _
    $region31: #{tpu_custom_call.1} parent=1 // pred_check_branch
      %62 = sbr.rel (0) target = $region33
    $region32: #{tpu_custom_call.1} parent=1 // pred_region
      %63 = dma.done [#allocation11], 512
    $region33: #{tpu_custom_call.1} parent=1 // pred_fallthru
      _
    %p64 = scmp.eq.s32.totalorder 0, 0
    // Predicated region
    $region34: #{tpu_custom_call.1} parent=1 // pred_check
      %p65 = pneg %p64
    $region35: #{tpu_custom_call.1} parent=1 // pred_check_branch
      %67 = sbr.rel (%p65) target = $region37
    $region36: #{tpu_custom_call.1} parent=1 // pred_region
      %vm68 = vcmask 254976
      %69 = vst.msk [vmem:[#allocation2] sm:$0x3] %vm68, 0.0
      %70 = vst.msk [vmem:[#allocation3] sm:$0x3] %vm68, 0.0
      %71 = vst.msk [vmem:[#allocation4] sm:$0x3] %vm68, 0.0
    $region37: #{tpu_custom_call.1} parent=1 // pred_fallthru
      _
    %s72 = smul.u32 0, 8
    %s73 = sld [smem:[#allocation6]]
    %p74 = scmp.lt.s32.totalorder %s72, %s73
    // Predicated region
    $region38: #{tpu_custom_call.1} parent=1 // pred_check
      %p75 = pneg %p74
    $region39: #{tpu_custom_call.1} parent=1 // pred_check_branch
      %77 = sbr.rel (%p75) target = $region41
    $region40: #{tpu_custom_call.1} parent=1 // pred_region
      %v78 = vld [vmem:[#allocation10] sm:$0xff]
      %v79 = vld [vmem:[#allocation10 + $0x8] sm:$0xff]
      %v80 = vld [vmem:[#allocation10 + $0x10] sm:$0xff]
      %v81 = vld [vmem:[#allocation10 + $0x18] sm:$0xff]
      %v82 = vld [vmem:[%s1] sm:$0x3]
      %v83 = vsub.s32 %v82, 1
      %v84 = vld [vmem:[#allocation2] sm:$0x3]
      %v85 = vld [vmem:[#allocation3] sm:$0x3]
      %v86 = vld [vmem:[#allocation4] sm:$0x3]
      %v87 = vld [vmem:[#allocation7] sm:$0x1]
      %v88 = vld [vmem:[#allocation7 + $0x8] sm:$0x1]
      %vm89 = vcmask 261120
      %v91 = vsel %vm89, %v84, 0
      %93 = vmatprep.subr.mxu0 0.0
      %94 = vmatpush1.msra.mxu0 0.0
      %95 = vmatprep.subr.mxu0 0.0
      %96 = vmatpush1.msra.mxu0 0.0
      %97 = vmatprep.subr.mxu0 0.0
      %98 = vmatpush1.msra.mxu0 0.0
      %99 = vmatprep.subr.mxu0 0.0
      %100 = vmatpush1.msra.mxu0 0.0
      %101 = vmatprep.subr.mxu0 0.0
      %102 = vmatpush1.msra.mxu0 0.0
      %103 = vmatprep.subr.mxu0 0.0
      %104 = vmatpush1.msra.mxu0 0.0
      %105 = vmatprep.subr.mxu0 0.0
      %106 = vmatpush1.msra.mxu0 0.0
      %107 = vmatprep.subr.mxu0 0.0
      %108 = vmatpush1.msra.mxu0 0.0
      %109 = vmatprep.subr.mxu0 0.0
      %110 = vmatpush1.msra.mxu0 0.0
      %111 = vmatprep.subr.mxu0 0.0
      %112 = vmatpush1.msra.mxu0 0.0
      %113 = vmatprep.subr.mxu0 0.0
      %114 = vmatpush1.msra.mxu0 0.0
      %115 = vmatprep.subr.mxu0 0.0
      %116 = vmatpush1.msra.mxu0 0.0
      %117 = vmatprep.subr.mxu0 0.0
      %118 = vmatpush1.msra.mxu0 %v81
      %119 = vmatprep.subr.mxu0 0.0
      %120 = vmatpush1.msra.mxu0 %v80
      %121 = vmatprep.subr.mxu0 0.0
      %122 = vmatpush1.msra.mxu0 %v79
      %123 = vmatprep.subr.mxu0 0.0
      %124 = vmatpush1.msra.mxu0 %v78
      %125 = vmatprep.subr.mxu0 0.0
      %126 = vmatpush2.msra.mxu0 0.0
      %127 = vmatprep.subr.mxu0 0.0
      %128 = vmatpush2.msra.mxu0 0.0
      %129 = vmatprep.subr.mxu0 0.0
      %130 = vmatpush2.msra.mxu0 0.0
      %131 = vmatprep.subr.mxu0 0.0
      %132 = vmatpush2.msra.mxu0 0.0
      %133 = vmatprep.subr.mxu0 0.0
      %134 = vmatpush2.msra.mxu0 0.0
      %135 = vmatprep.subr.mxu0 0.0
      %136 = vmatpush2.msra.mxu0 0.0
      %137 = vmatprep.subr.mxu0 0.0
      %138 = vmatpush2.msra.mxu0 0.0
      %139 = vmatprep.subr.mxu0 0.0
      %140 = vmatpush2.msra.mxu0 0.0
      %141 = vmatprep.subr.mxu0 0.0
      %142 = vmatpush2.msra.mxu0 0.0
      %143 = vmatprep.subr.mxu0 0.0
      %144 = vmatpush2.msra.mxu0 0.0
      %145 = vmatprep.subr.mxu0 0.0
      %146 = vmatpush2.msra.mxu0 0.0
      %147 = vmatprep.subr.mxu0 0.0
      %148 = vmatpush2.msra.mxu0 0.0
      %149 = vmatprep.subr.mxu0 0.0
      %150 = vmatpush2.msra.mxu0 0.0
      %151 = vmatprep.subr.mxu0 0.0
      %152 = vmatpush2.msra.mxu0 0.0
      %153 = vmatprep.subr.mxu0 0.0
      %154 = vmatpush2.msra.mxu0 0.0
      %155 = vmatprep.subr.mxu0 0.0
      %156 = vmatpush2.msra.mxu0 0.0
      %157 = vmatprep.mubr.f32.mxu0 0.0
      %158 = vmatmul.mubr.f32.gmra.mxu0 %v91
      %v159 = vpop.f32.mrf.mxu0
      %v160 = vadd.f32 0.0, %v159
      %v161 = vpop.f32.mrf.mxu0
      %162 = vdwg.mxu0
      %v164 = vrot.slane %v160, 1
      %v167 = vadd.f32 %v87, %v160
      %v168 = vadd.f32 %v88, %v164
      %v169 = vxor.u32 %v167, 2147483648
      %v170 = vxor.u32 %v168, 2147483648
      %v171 = vmul.f32 %v169, 1.442695
      %v172 = vpow.pop %v171
      %v173 = vmul.f32 %v170, 1.442695
      %v174 = vpow.pop %v173
      %v175 = vadd.f32 %v172, 1.0
      %v176 = vadd.f32 %v174, 1.0
      %v177 = vrcp.pop %v175
      %v178 = vmul.f32 1.0, %v177
      %v179 = vrcp.pop %v176
      %v180 = vmul.f32 1.0, %v179
      %v181 = vtanh.pop %v167
      %v182 = vtanh.pop %v168
      %v184 = vrot.slane %v85, 1
      %185 = vrot.lane.b32.xlu0 %v85, 32
      %v186 = vpop.permute.xlu0 %185
      %187 = vrot.lane.b32.xlu0 %v184, 32
      %v188 = vpop.permute.xlu0 %187
      %v191 = vmul.f32 %v178, %v186
      %v192 = vmul.f32 %v180, %v188
      %195 = vrot.lane.b32.xlu0 %v181, 32
      %v196 = vpop.permute.xlu0 %195
      %197 = vrot.lane.b32.xlu0 %v182, 32
      %v198 = vpop.permute.xlu0 %197
      %v201 = vmul.f32 %v178, %v196
      %v202 = vmul.f32 %v180, %v198
      %205 = vrot.lane.b32.xlu0 %v201, 32
      %v206 = vpop.permute.xlu0 %205
      %207 = vrot.lane.b32.xlu0 %v202, 32
      %v208 = vpop.permute.xlu0 %207
      %v211 = vadd.f32 %v191, %v206
      %v212 = vadd.f32 %v192, %v208
      %v213 = vtanh.pop %v211
      %v214 = vtanh.pop %v212
      %217 = vrot.lane.b32.xlu0 %v213, 32
      %v218 = vpop.permute.xlu0 %217
      %219 = vrot.lane.b32.xlu0 %v214, 32
      %v220 = vpop.permute.xlu0 %219
      %v223 = vmul.f32 %v178, %v218
      %v224 = vmul.f32 %v180, %v220
      %v225 = vstv %s72
      %vm226 = vcmp.eq.s32.totalorder %v83, %v225
      %v227 = vsel %vm226, 1, 0
      %228 = vset.pattern.permute.xlu0 0
      %229 = vperm.xlu0 %228, %v227
      %v230 = vpop.permute.xlu0 %229
      %vm231 = vcmp.eq.s32.totalorder %v230, 1
      %v234 = vrot.slane %v224, 7
      %vm235 = vcmask 1041409
      %v236 = vsel %vm235, %v234, %v223
      %237 = vrot.lane.b32.xlu0 %v236, 64
      %v238 = vpop.permute.xlu0 %237
      %v240 = vsel %vm231, %v238, %v86
      %s241 = sadd.s32 %s72, 1
      %v242 = vld [vmem:[#allocation7 + $0x1] sm:$0x1]
      %v243 = vld [vmem:[#allocation7 + $0x9] sm:$0x1]
      %v244 = vsel %vm89, %v238, 0
      %246 = vmatprep.subr.mxu0 0.0
      %247 = vmatpush1.msra.mxu0 0.0
      %248 = vmatprep.subr.mxu0 0.0
      %249 = vmatpush1.msra.mxu0 0.0
      %250 = vmatprep.subr.mxu0 0.0
      %251 = vmatpush1.msra.mxu0 0.0
      %252 = vmatprep.subr.mxu0 0.0
      %253 = vmatpush1.msra.mxu0 0.0
      %254 = vmatprep.subr.mxu0 0.0
      %255 = vmatpush1.msra.mxu0 0.0
      %256 = vmatprep.subr.mxu0 0.0
      %257 = vmatpush1.msra.mxu0 0.0
      %258 = vmatprep.subr.mxu0 0.0
      %259 = vmatpush1.msra.mxu0 0.0
      %260 = vmatprep.subr.mxu0 0.0
      %261 = vmatpush1.msra.mxu0 0.0
      %262 = vmatprep.subr.mxu0 0.0
      %263 = vmatpush1.msra.mxu0 0.0
      %264 = vmatprep.subr.mxu0 0.0
      %265 = vmatpush1.msra.mxu0 0.0
      %266 = vmatprep.subr.mxu0 0.0
      %267 = vmatpush1.msra.mxu0 0.0
      %268 = vmatprep.subr.mxu0 0.0
      %269 = vmatpush1.msra.mxu0 0.0
      %270 = vmatprep.subr.mxu0 0.0
      %271 = vmatpush1.msra.mxu0 %v81
      %272 = vmatprep.subr.mxu0 0.0
      %273 = vmatpush1.msra.mxu0 %v80
      %274 = vmatprep.subr.mxu0 0.0
      %275 = vmatpush1.msra.mxu0 %v79
      %276 = vmatprep.subr.mxu0 0.0
      %277 = vmatpush1.msra.mxu0 %v78
      %278 = vmatprep.subr.mxu0 0.0
      %279 = vmatpush2.msra.mxu0 0.0
      %280 = vmatprep.subr.mxu0 0.0
      %281 = vmatpush2.msra.mxu0 0.0
      %282 = vmatprep.subr.mxu0 0.0
      %283 = vmatpush2.msra.mxu0 0.0
      %284 = vmatprep.subr.mxu0 0.0
      %285 = vmatpush2.msra.mxu0 0.0
      %286 = vmatprep.subr.mxu0 0.0
      %287 = vmatpush2.msra.mxu0 0.0
      %288 = vmatprep.subr.mxu0 0.0
      %289 = vmatpush2.msra.mxu0 0.0
      %290 = vmatprep.subr.mxu0 0.0
      %291 = vmatpush2.msra.mxu0 0.0
      %292 = vmatprep.subr.mxu0 0.0
      %293 = vmatpush2.msra.mxu0 0.0
      %294 = vmatprep.subr.mxu0 0.0
      %295 = vmatpush2.msra.mxu0 0.0
      %296 = vmatprep.subr.mxu0 0.0
      %297 = vmatpush2.msra.mxu0 0.0
      %298 = vmatprep.subr.mxu0 0.0
      %299 = vmatpush2.msra.mxu0 0.0
      %300 = vmatprep.subr.mxu0 0.0
      %301 = vmatpush2.msra.mxu0 0.0
      %302 = vmatprep.subr.mxu0 0.0
      %303 = vmatpush2.msra.mxu0 0.0
      %304 = vmatprep.subr.mxu0 0.0
      %305 = vmatpush2.msra.mxu0 0.0
      %306 = vmatprep.subr.mxu0 0.0
      %307 = vmatpush2.msra.mxu0 0.0
      %308 = vmatprep.subr.mxu0 0.0
      %309 = vmatpush2.msra.mxu0 0.0
      %310 = vmatprep.mubr.f32.mxu0 0.0
      %311 = vmatmul.mubr.f32.gmra.mxu0 %v244
      %v312 = vpop.f32.mrf.mxu0
      %v313 = vadd.f32 0.0, %v312
      %v314 = vpop.f32.mrf.mxu0
      %315 = vdwg.mxu0
      %v317 = vrot.slane %v313, 1
      %v320 = vadd.f32 %v242, %v313
      %v321 = vadd.f32 %v243, %v317
      %v322 = vxor.u32 %v320, 2147483648
      %v323 = vxor.u32 %v321, 2147483648
      %v324 = vmul.f32 %v322, 1.442695
      %v325 = vpow.pop %v324
      %v326 = vmul.f32 %v323, 1.442695
      %v327 = vpow.pop %v326
      %v328 = vadd.f32 %v325, 1.0
      %v329 = vadd.f32 %v327, 1.0
      %v330 = vrcp.pop %v328
      %v331 = vmul.f32 1.0, %v330
      %v332 = vrcp.pop %v329
      %v333 = vmul.f32 1.0, %v332
      %v334 = vtanh.pop %v320
      %v335 = vtanh.pop %v321
      %v336 = vmul.f32 %v331, %v211
      %v337 = vmul.f32 %v333, %v212
      %340 = vrot.lane.b32.xlu0 %v334, 32
      %v341 = vpop.permute.xlu0 %340
      %342 = vrot.lane.b32.xlu0 %v335, 32
      %v343 = vpop.permute.xlu0 %342
      %v346 = vmul.f32 %v331, %v341
      %v347 = vmul.f32 %v333, %v343
      %350 = vrot.lane.b32.xlu0 %v346, 32
      %v351 = vpop.permute.xlu0 %350
      %352 = vrot.lane.b32.xlu0 %v347, 32
      %v353 = vpop.permute.xlu0 %352
      %v356 = vadd.f32 %v336, %v351
      %v357 = vadd.f32 %v337, %v353
      %v358 = vtanh.pop %v356
      %v359 = vtanh.pop %v357
      %362 = vrot.lane.b32.xlu0 %v358, 32
      %v363 = vpop.permute.xlu0 %362
      %364 = vrot.lane.b32.xlu0 %v359, 32
      %v365 = vpop.permute.xlu0 %364
      %v368 = vmul.f32 %v331, %v363
      %v369 = vmul.f32 %v333, %v365
      %v370 = vstv %s241
      %vm371 = vcmp.eq.s32.totalorder %v83, %v370
      %v372 = vsel %vm371, 1, 0
      %373 = vset.pattern.permute.xlu0 0
      %374 = vperm.xlu0 %373, %v372
      %v375 = vpop.permute.xlu0 %374
      %vm376 = vcmp.eq.s32.totalorder %v375, 1
      %v379 = vrot.slane %v369, 7
      %v380 = vsel %vm235, %v379, %v368
      %381 = vrot.lane.b32.xlu0 %v380, 64
      %v382 = vpop.permute.xlu0 %381
      %v384 = vsel %vm376, %v382, %v240
      %s385 = sadd.s32 %s72, 2
      %v386 = vld [vmem:[#allocation7 + $0x2] sm:$0x1]
      %v387 = vld [vmem:[#allocation7 + $0xa] sm:$0x1]
      %v388 = vsel %vm89, %v382, 0
      %390 = vmatprep.subr.mxu0 0.0
      %391 = vmatpush1.msra.mxu0 0.0
      %392 = vmatprep.subr.mxu0 0.0
      %393 = vmatpush1.msra.mxu0 0.0
      %394 = vmatprep.subr.mxu0 0.0
      %395 = vmatpush1.msra.mxu0 0.0
      %396 = vmatprep.subr.mxu0 0.0
      %397 = vmatpush1.msra.mxu0 0.0
      %398 = vmatprep.subr.mxu0 0.0
      %399 = vmatpush1.msra.mxu0 0.0
      %400 = vmatprep.subr.mxu0 0.0
      %401 = vmatpush1.msra.mxu0 0.0
      %402 = vmatprep.subr.mxu0 0.0
      %403 = vmatpush1.msra.mxu0 0.0
      %404 = vmatprep.subr.mxu0 0.0
      %405 = vmatpush1.msra.mxu0 0.0
      %406 = vmatprep.subr.mxu0 0.0
      %407 = vmatpush1.msra.mxu0 0.0
      %408 = vmatprep.subr.mxu0 0.0
      %409 = vmatpush1.msra.mxu0 0.0
      %410 = vmatprep.subr.mxu0 0.0
      %411 = vmatpush1.msra.mxu0 0.0
      %412 = vmatprep.subr.mxu0 0.0
      %413 = vmatpush1.msra.mxu0 0.0
      %414 = vmatprep.subr.mxu0 0.0
      %415 = vmatpush1.msra.mxu0 %v81
      %416 = vmatprep.subr.mxu0 0.0
      %417 = vmatpush1.msra.mxu0 %v80
      %418 = vmatprep.subr.mxu0 0.0
      %419 = vmatpush1.msra.mxu0 %v79
      %420 = vmatprep.subr.mxu0 0.0
      %421 = vmatpush1.msra.mxu0 %v78
      %422 = vmatprep.subr.mxu0 0.0
      %423 = vmatpush2.msra.mxu0 0.0
      %424 = vmatprep.subr.mxu0 0.0
      %425 = vmatpush2.msra.mxu0 0.0
      %426 = vmatprep.subr.mxu0 0.0
      %427 = vmatpush2.msra.mxu0 0.0
      %428 = vmatprep.subr.mxu0 0.0
      %429 = vmatpush2.msra.mxu0 0.0
      %430 = vmatprep.subr.mxu0 0.0
      %431 = vmatpush2.msra.mxu0 0.0
      %432 = vmatprep.subr.mxu0 0.0
      %433 = vmatpush2.msra.mxu0 0.0
      %434 = vmatprep.subr.mxu0 0.0
      %435 = vmatpush2.msra.mxu0 0.0
      %436 = vmatprep.subr.mxu0 0.0
      %437 = vmatpush2.msra.mxu0 0.0
      %438 = vmatprep.subr.mxu0 0.0
      %439 = vmatpush2.msra.mxu0 0.0
      %440 = vmatprep.subr.mxu0 0.0
      %441 = vmatpush2.msra.mxu0 0.0
      %442 = vmatprep.subr.mxu0 0.0
      %443 = vmatpush2.msra.mxu0 0.0
      %444 = vmatprep.subr.mxu0 0.0
      %445 = vmatpush2.msra.mxu0 0.0
      %446 = vmatprep.subr.mxu0 0.0
      %447 = vmatpush2.msra.mxu0 0.0
      %448 = vmatprep.subr.mxu0 0.0
      %449 = vmatpush2.msra.mxu0 0.0
      %450 = vmatprep.subr.mxu0 0.0
      %451 = vmatpush2.msra.mxu0 0.0
      %452 = vmatprep.subr.mxu0 0.0
      %453 = vmatpush2.msra.mxu0 0.0
      %454 = vmatprep.mubr.f32.mxu0 0.0
      %455 = vmatmul.mubr.f32.gmra.mxu0 %v388
      %v456 = vpop.f32.mrf.mxu0
      %v457 = vadd.f32 0.0, %v456
      %v458 = vpop.f32.mrf.mxu0
      %459 = vdwg.mxu0
      %v461 = vrot.slane %v457, 1
      %v464 = vadd.f32 %v386, %v457
      %v465 = vadd.f32 %v387, %v461
      %v466 = vxor.u32 %v464, 2147483648
      %v467 = vxor.u32 %v465, 2147483648
      %v468 = vmul.f32 %v466, 1.442695
      %v469 = vpow.pop %v468
      %v470 = vmul.f32 %v467, 1.442695
      %v471 = vpow.pop %v470
      %v472 = vadd.f32 %v469, 1.0
      %v473 = vadd.f32 %v471, 1.0
      %v474 = vrcp.pop %v472
      %v475 = vmul.f32 1.0, %v474
      %v476 = vrcp.pop %v473
      %v477 = vmul.f32 1.0, %v476
      %v478 = vtanh.pop %v464
      %v479 = vtanh.pop %v465
      %v480 = vmul.f32 %v475, %v356
      %v481 = vmul.f32 %v477, %v357
      %484 = vrot.lane.b32.xlu0 %v478, 32
      %v485 = vpop.permute.xlu0 %484
      %486 = vrot.lane.b32.xlu0 %v479, 32
      %v487 = vpop.permute.xlu0 %486
      %v490 = vmul.f32 %v475, %v485
      %v491 = vmul.f32 %v477, %v487
      %494 = vrot.lane.b32.xlu0 %v490, 32
      %v495 = vpop.permute.xlu0 %494
      %496 = vrot.lane.b32.xlu0 %v491, 32
      %v497 = vpop.permute.xlu0 %496
      %v500 = vadd.f32 %v480, %v495
      %v501 = vadd.f32 %v481, %v497
      %v502 = vtanh.pop %v500
      %v503 = vtanh.pop %v501
      %506 = vrot.lane.b32.xlu0 %v502, 32
      %v507 = vpop.permute.xlu0 %506
      %508 = vrot.lane.b32.xlu0 %v503, 32
      %v509 = vpop.permute.xlu0 %508
      %v512 = vmul.f32 %v475, %v507
      %v513 = vmul.f32 %v477, %v509
      %v514 = vstv %s385
      %vm515 = vcmp.eq.s32.totalorder %v83, %v514
      %v516 = vsel %vm515, 1, 0
      %517 = vset.pattern.permute.xlu0 0
      %518 = vperm.xlu0 %517, %v516
      %v519 = vpop.permute.xlu0 %518
      %vm520 = vcmp.eq.s32.totalorder %v519, 1
      %v523 = vrot.slane %v513, 7
      %v524 = vsel %vm235, %v523, %v512
      %525 = vrot.lane.b32.xlu0 %v524, 64
      %v526 = vpop.permute.xlu0 %525
      %v528 = vsel %vm520, %v526, %v384
      %s529 = sadd.s32 %s72, 3
      %v530 = vld [vmem:[#allocation7 + $0x3] sm:$0x1]
      %v531 = vld [vmem:[#allocation7 + $0xb] sm:$0x1]
      %v532 = vsel %vm89, %v526, 0
      %534 = vmatprep.subr.mxu0 0.0
      %535 = vmatpush1.msra.mxu0 0.0
      %536 = vmatprep.subr.mxu0 0.0
      %537 = vmatpush1.msra.mxu0 0.0
      %538 = vmatprep.subr.mxu0 0.0
      %539 = vmatpush1.msra.mxu0 0.0
      %540 = vmatprep.subr.mxu0 0.0
      %541 = vmatpush1.msra.mxu0 0.0
      %542 = vmatprep.subr.mxu0 0.0
      %543 = vmatpush1.msra.mxu0 0.0
      %544 = vmatprep.subr.mxu0 0.0
      %545 = vmatpush1.msra.mxu0 0.0
      %546 = vmatprep.subr.mxu0 0.0
      %547 = vmatpush1.msra.mxu0 0.0
      %548 = vmatprep.subr.mxu0 0.0
      %549 = vmatpush1.msra.mxu0 0.0
      %550 = vmatprep.subr.mxu0 0.0
      %551 = vmatpush1.msra.mxu0 0.0
      %552 = vmatprep.subr.mxu0 0.0
      %553 = vmatpush1.msra.mxu0 0.0
      %554 = vmatprep.subr.mxu0 0.0
      %555 = vmatpush1.msra.mxu0 0.0
      %556 = vmatprep.subr.mxu0 0.0
      %557 = vmatpush1.msra.mxu0 0.0
      %558 = vmatprep.subr.mxu0 0.0
      %559 = vmatpush1.msra.mxu0 %v81
      %560 = vmatprep.subr.mxu0 0.0
      %561 = vmatpush1.msra.mxu0 %v80
      %562 = vmatprep.subr.mxu0 0.0
      %563 = vmatpush1.msra.mxu0 %v79
      %564 = vmatprep.subr.mxu0 0.0
      %565 = vmatpush1.msra.mxu0 %v78
      %566 = vmatprep.subr.mxu0 0.0
      %567 = vmatpush2.msra.mxu0 0.0
      %568 = vmatprep.subr.mxu0 0.0
      %569 = vmatpush2.msra.mxu0 0.0
      %570 = vmatprep.subr.mxu0 0.0
      %571 = vmatpush2.msra.mxu0 0.0
      %572 = vmatprep.subr.mxu0 0.0
      %573 = vmatpush2.msra.mxu0 0.0
      %574 = vmatprep.subr.mxu0 0.0
      %575 = vmatpush2.msra.mxu0 0.0
      %576 = vmatprep.subr.mxu0 0.0
      %577 = vmatpush2.msra.mxu0 0.0
      %578 = vmatprep.subr.mxu0 0.0
      %579 = vmatpush2.msra.mxu0 0.0
      %580 = vmatprep.subr.mxu0 0.0
      %581 = vmatpush2.msra.mxu0 0.0
      %582 = vmatprep.subr.mxu0 0.0
      %583 = vmatpush2.msra.mxu0 0.0
      %584 = vmatprep.subr.mxu0 0.0
      %585 = vmatpush2.msra.mxu0 0.0
      %586 = vmatprep.subr.mxu0 0.0
      %587 = vmatpush2.msra.mxu0 0.0
      %588 = vmatprep.subr.mxu0 0.0
      %589 = vmatpush2.msra.mxu0 0.0
      %590 = vmatprep.subr.mxu0 0.0
      %591 = vmatpush2.msra.mxu0 0.0
      %592 = vmatprep.subr.mxu0 0.0
      %593 = vmatpush2.msra.mxu0 0.0
      %594 = vmatprep.subr.mxu0 0.0
      %595 = vmatpush2.msra.mxu0 0.0
      %596 = vmatprep.subr.mxu0 0.0
      %597 = vmatpush2.msra.mxu0 0.0
      %598 = vmatprep.mubr.f32.mxu0 0.0
      %599 = vmatmul.mubr.f32.gmra.mxu0 %v532
      %v600 = vpop.f32.mrf.mxu0
      %v601 = vadd.f32 0.0, %v600
      %v602 = vpop.f32.mrf.mxu0
      %603 = vdwg.mxu0
      %v605 = vrot.slane %v601, 1
      %v608 = vadd.f32 %v530, %v601
      %v609 = vadd.f32 %v531, %v605
      %v610 = vxor.u32 %v608, 2147483648
      %v611 = vxor.u32 %v609, 2147483648
      %v612 = vmul.f32 %v610, 1.442695
      %v613 = vpow.pop %v612
      %v614 = vmul.f32 %v611, 1.442695
      %v615 = vpow.pop %v614
      %v616 = vadd.f32 %v613, 1.0
      %v617 = vadd.f32 %v615, 1.0
      %v618 = vrcp.pop %v616
      %v619 = vmul.f32 1.0, %v618
      %v620 = vrcp.pop %v617
      %v621 = vmul.f32 1.0, %v620
      %v622 = vtanh.pop %v608
      %v623 = vtanh.pop %v609
      %v624 = vmul.f32 %v619, %v500
      %v625 = vmul.f32 %v621, %v501
      %628 = vrot.lane.b32.xlu0 %v622, 32
      %v629 = vpop.permute.xlu0 %628
      %630 = vrot.lane.b32.xlu0 %v623, 32
      %v631 = vpop.permute.xlu0 %630
      %v634 = vmul.f32 %v619, %v629
      %v635 = vmul.f32 %v621, %v631
      %638 = vrot.lane.b32.xlu0 %v634, 32
      %v639 = vpop.permute.xlu0 %638
      %640 = vrot.lane.b32.xlu0 %v635, 32
      %v641 = vpop.permute.xlu0 %640
      %v644 = vadd.f32 %v624, %v639
      %v645 = vadd.f32 %v625, %v641
      %v646 = vtanh.pop %v644
      %v647 = vtanh.pop %v645
      %650 = vrot.lane.b32.xlu0 %v646, 32
      %v651 = vpop.permute.xlu0 %650
      %652 = vrot.lane.b32.xlu0 %v647, 32
      %v653 = vpop.permute.xlu0 %652
      %v656 = vmul.f32 %v619, %v651
      %v657 = vmul.f32 %v621, %v653
      %v658 = vstv %s529
      %vm659 = vcmp.eq.s32.totalorder %v83, %v658
      %v660 = vsel %vm659, 1, 0
      %661 = vset.pattern.permute.xlu0 0
      %662 = vperm.xlu0 %661, %v660
      %v663 = vpop.permute.xlu0 %662
      %vm664 = vcmp.eq.s32.totalorder %v663, 1
      %v667 = vrot.slane %v657, 7
      %v668 = vsel %vm235, %v667, %v656
      %669 = vrot.lane.b32.xlu0 %v668, 64
      %v670 = vpop.permute.xlu0 %669
      %v672 = vsel %vm664, %v670, %v528
      %s673 = sadd.s32 %s72, 4
      %v674 = vld [vmem:[#allocation7 + $0x4] sm:$0x1]
      %v675 = vld [vmem:[#allocation7 + $0xc] sm:$0x1]
      %v676 = vsel %vm89, %v670, 0
      %678 = vmatprep.subr.mxu0 0.0
      %679 = vmatpush1.msra.mxu0 0.0
      %680 = vmatprep.subr.mxu0 0.0
      %681 = vmatpush1.msra.mxu0 0.0
      %682 = vmatprep.subr.mxu0 0.0
      %683 = vmatpush1.msra.mxu0 0.0
      %684 = vmatprep.subr.mxu0 0.0
      %685 = vmatpush1.msra.mxu0 0.0
      %686 = vmatprep.subr.mxu0 0.0
      %687 = vmatpush1.msra.mxu0 0.0
      %688 = vmatprep.subr.mxu0 0.0
      %689 = vmatpush1.msra.mxu0 0.0
      %690 = vmatprep.subr.mxu0 0.0
      %691 = vmatpush1.msra.mxu0 0.0
      %692 = vmatprep.subr.mxu0 0.0
      %693 = vmatpush1.msra.mxu0 0.0
      %694 = vmatprep.subr.mxu0 0.0
      %695 = vmatpush1.msra.mxu0 0.0
      %696 = vmatprep.subr.mxu0 0.0
      %697 = vmatpush1.msra.mxu0 0.0
      %698 = vmatprep.subr.mxu0 0.0
      %699 = vmatpush1.msra.mxu0 0.0
      %700 = vmatprep.subr.mxu0 0.0
      %701 = vmatpush1.msra.mxu0 0.0
      %702 = vmatprep.subr.mxu0 0.0
      %703 = vmatpush1.msra.mxu0 %v81
      %704 = vmatprep.subr.mxu0 0.0
      %705 = vmatpush1.msra.mxu0 %v80
      %706 = vmatprep.subr.mxu0 0.0
      %707 = vmatpush1.msra.mxu0 %v79
      %708 = vmatprep.subr.mxu0 0.0
      %709 = vmatpush1.msra.mxu0 %v78
      %710 = vmatprep.subr.mxu0 0.0
      %711 = vmatpush2.msra.mxu0 0.0
      %712 = vmatprep.subr.mxu0 0.0
      %713 = vmatpush2.msra.mxu0 0.0
      %714 = vmatprep.subr.mxu0 0.0
      %715 = vmatpush2.msra.mxu0 0.0
      %716 = vmatprep.subr.mxu0 0.0
      %717 = vmatpush2.msra.mxu0 0.0
      %718 = vmatprep.subr.mxu0 0.0
      %719 = vmatpush2.msra.mxu0 0.0
      %720 = vmatprep.subr.mxu0 0.0
      %721 = vmatpush2.msra.mxu0 0.0
      %722 = vmatprep.subr.mxu0 0.0
      %723 = vmatpush2.msra.mxu0 0.0
      %724 = vmatprep.subr.mxu0 0.0
      %725 = vmatpush2.msra.mxu0 0.0
      %726 = vmatprep.subr.mxu0 0.0
      %727 = vmatpush2.msra.mxu0 0.0
      %728 = vmatprep.subr.mxu0 0.0
      %729 = vmatpush2.msra.mxu0 0.0
      %730 = vmatprep.subr.mxu0 0.0
      %731 = vmatpush2.msra.mxu0 0.0
      %732 = vmatprep.subr.mxu0 0.0
      %733 = vmatpush2.msra.mxu0 0.0
      %734 = vmatprep.subr.mxu0 0.0
      %735 = vmatpush2.msra.mxu0 0.0
      %736 = vmatprep.subr.mxu0 0.0
      %737 = vmatpush2.msra.mxu0 0.0
      %738 = vmatprep.subr.mxu0 0.0
      %739 = vmatpush2.msra.mxu0 0.0
      %740 = vmatprep.subr.mxu0 0.0
      %741 = vmatpush2.msra.mxu0 0.0
      %742 = vmatprep.mubr.f32.mxu0 0.0
      %743 = vmatmul.mubr.f32.gmra.mxu0 %v676
      %v744 = vpop.f32.mrf.mxu0
      %v745 = vadd.f32 0.0, %v744
      %v746 = vpop.f32.mrf.mxu0
      %747 = vdwg.mxu0
      %v749 = vrot.slane %v745, 1
      %v752 = vadd.f32 %v674, %v745
      %v753 = vadd.f32 %v675, %v749
      %v754 = vxor.u32 %v752, 2147483648
      %v755 = vxor.u32 %v753, 2147483648
      %v756 = vmul.f32 %v754, 1.442695
      %v757 = vpow.pop %v756
      %v758 = vmul.f32 %v755, 1.442695
      %v759 = vpow.pop %v758
      %v760 = vadd.f32 %v757, 1.0
      %v761 = vadd.f32 %v759, 1.0
      %v762 = vrcp.pop %v760
      %v763 = vmul.f32 1.0, %v762
      %v764 = vrcp.pop %v761
      %v765 = vmul.f32 1.0, %v764
      %v766 = vtanh.pop %v752
      %v767 = vtanh.pop %v753
      %v768 = vmul.f32 %v763, %v644
      %v769 = vmul.f32 %v765, %v645
      %772 = vrot.lane.b32.xlu0 %v766, 32
      %v773 = vpop.permute.xlu0 %772
      %774 = vrot.lane.b32.xlu0 %v767, 32
      %v775 = vpop.permute.xlu0 %774
      %v778 = vmul.f32 %v763, %v773
      %v779 = vmul.f32 %v765, %v775
      %782 = vrot.lane.b32.xlu0 %v778, 32
      %v783 = vpop.permute.xlu0 %782
      %784 = vrot.lane.b32.xlu0 %v779, 32
      %v785 = vpop.permute.xlu0 %784
      %v788 = vadd.f32 %v768, %v783
      %v789 = vadd.f32 %v769, %v785
      %v790 = vtanh.pop %v788
      %v791 = vtanh.pop %v789
      %794 = vrot.lane.b32.xlu0 %v790, 32
      %v795 = vpop.permute.xlu0 %794
      %796 = vrot.lane.b32.xlu0 %v791, 32
      %v797 = vpop.permute.xlu0 %796
      %v800 = vmul.f32 %v763, %v795
      %v801 = vmul.f32 %v765, %v797
      %v802 = vstv %s673
      %vm803 = vcmp.eq.s32.totalorder %v83, %v802
      %v804 = vsel %vm803, 1, 0
      %805 = vset.pattern.permute.xlu0 0
      %806 = vperm.xlu0 %805, %v804
      %v807 = vpop.permute.xlu0 %806
      %vm808 = vcmp.eq.s32.totalorder %v807, 1
      %v811 = vrot.slane %v801, 7
      %v812 = vsel %vm235, %v811, %v800
      %813 = vrot.lane.b32.xlu0 %v812, 64
      %v814 = vpop.permute.xlu0 %813
      %v816 = vsel %vm808, %v814, %v672
      %s817 = sadd.s32 %s72, 5
      %v818 = vld [vmem:[#allocation7 + $0x5] sm:$0x1]
      %v819 = vld [vmem:[#allocation7 + $0xd] sm:$0x1]
      %v820 = vsel %vm89, %v814, 0
      %822 = vmatprep.subr.mxu0 0.0
      %823 = vmatpush1.msra.mxu0 0.0
      %824 = vmatprep.subr.mxu0 0.0
      %825 = vmatpush1.msra.mxu0 0.0
      %826 = vmatprep.subr.mxu0 0.0
      %827 = vmatpush1.msra.mxu0 0.0
      %828 = vmatprep.subr.mxu0 0.0
      %829 = vmatpush1.msra.mxu0 0.0
      %830 = vmatprep.subr.mxu0 0.0
      %831 = vmatpush1.msra.mxu0 0.0
      %832 = vmatprep.subr.mxu0 0.0
      %833 = vmatpush1.msra.mxu0 0.0
      %834 = vmatprep.subr.mxu0 0.0
      %835 = vmatpush1.msra.mxu0 0.0
      %836 = vmatprep.subr.mxu0 0.0
      %837 = vmatpush1.msra.mxu0 0.0
      %838 = vmatprep.subr.mxu0 0.0
      %839 = vmatpush1.msra.mxu0 0.0
      %840 = vmatprep.subr.mxu0 0.0
      %841 = vmatpush1.msra.mxu0 0.0
      %842 = vmatprep.subr.mxu0 0.0
      %843 = vmatpush1.msra.mxu0 0.0
      %844 = vmatprep.subr.mxu0 0.0
      %845 = vmatpush1.msra.mxu0 0.0
      %846 = vmatprep.subr.mxu0 0.0
      %847 = vmatpush1.msra.mxu0 %v81
      %848 = vmatprep.subr.mxu0 0.0
      %849 = vmatpush1.msra.mxu0 %v80
      %850 = vmatprep.subr.mxu0 0.0
      %851 = vmatpush1.msra.mxu0 %v79
      %852 = vmatprep.subr.mxu0 0.0
      %853 = vmatpush1.msra.mxu0 %v78
      %854 = vmatprep.subr.mxu0 0.0
      %855 = vmatpush2.msra.mxu0 0.0
      %856 = vmatprep.subr.mxu0 0.0
      %857 = vmatpush2.msra.mxu0 0.0
      %858 = vmatprep.subr.mxu0 0.0
      %859 = vmatpush2.msra.mxu0 0.0
      %860 = vmatprep.subr.mxu0 0.0
      %861 = vmatpush2.msra.mxu0 0.0
      %862 = vmatprep.subr.mxu0 0.0
      %863 = vmatpush2.msra.mxu0 0.0
      %864 = vmatprep.subr.mxu0 0.0
      %865 = vmatpush2.msra.mxu0 0.0
      %866 = vmatprep.subr.mxu0 0.0
      %867 = vmatpush2.msra.mxu0 0.0
      %868 = vmatprep.subr.mxu0 0.0
      %869 = vmatpush2.msra.mxu0 0.0
      %870 = vmatprep.subr.mxu0 0.0
      %871 = vmatpush2.msra.mxu0 0.0
      %872 = vmatprep.subr.mxu0 0.0
      %873 = vmatpush2.msra.mxu0 0.0
      %874 = vmatprep.subr.mxu0 0.0
      %875 = vmatpush2.msra.mxu0 0.0
      %876 = vmatprep.subr.mxu0 0.0
      %877 = vmatpush2.msra.mxu0 0.0
      %878 = vmatprep.subr.mxu0 0.0
      %879 = vmatpush2.msra.mxu0 0.0
      %880 = vmatprep.subr.mxu0 0.0
      %881 = vmatpush2.msra.mxu0 0.0
      %882 = vmatprep.subr.mxu0 0.0
      %883 = vmatpush2.msra.mxu0 0.0
      %884 = vmatprep.subr.mxu0 0.0
      %885 = vmatpush2.msra.mxu0 0.0
      %886 = vmatprep.mubr.f32.mxu0 0.0
      %887 = vmatmul.mubr.f32.gmra.mxu0 %v820
      %v888 = vpop.f32.mrf.mxu0
      %v889 = vadd.f32 0.0, %v888
      %v890 = vpop.f32.mrf.mxu0
      %891 = vdwg.mxu0
      %v893 = vrot.slane %v889, 1
      %v896 = vadd.f32 %v818, %v889
      %v897 = vadd.f32 %v819, %v893
      %v898 = vxor.u32 %v896, 2147483648
      %v899 = vxor.u32 %v897, 2147483648
      %v900 = vmul.f32 %v898, 1.442695
      %v901 = vpow.pop %v900
      %v902 = vmul.f32 %v899, 1.442695
      %v903 = vpow.pop %v902
      %v904 = vadd.f32 %v901, 1.0
      %v905 = vadd.f32 %v903, 1.0
      %v906 = vrcp.pop %v904
      %v907 = vmul.f32 1.0, %v906
      %v908 = vrcp.pop %v905
      %v909 = vmul.f32 1.0, %v908
      %v910 = vtanh.pop %v896
      %v911 = vtanh.pop %v897
      %v912 = vmul.f32 %v907, %v788
      %v913 = vmul.f32 %v909, %v789
      %916 = vrot.lane.b32.xlu0 %v910, 32
      %v917 = vpop.permute.xlu0 %916
      %918 = vrot.lane.b32.xlu0 %v911, 32
      %v919 = vpop.permute.xlu0 %918
      %v922 = vmul.f32 %v907, %v917
      %v923 = vmul.f32 %v909, %v919
      %926 = vrot.lane.b32.xlu0 %v922, 32
      %v927 = vpop.permute.xlu0 %926
      %928 = vrot.lane.b32.xlu0 %v923, 32
      %v929 = vpop.permute.xlu0 %928
      %v932 = vadd.f32 %v912, %v927
      %v933 = vadd.f32 %v913, %v929
      %v934 = vtanh.pop %v932
      %v935 = vtanh.pop %v933
      %938 = vrot.lane.b32.xlu0 %v934, 32
      %v939 = vpop.permute.xlu0 %938
      %940 = vrot.lane.b32.xlu0 %v935, 32
      %v941 = vpop.permute.xlu0 %940
      %v944 = vmul.f32 %v907, %v939
      %v945 = vmul.f32 %v909, %v941
      %v946 = vstv %s817
      %vm947 = vcmp.eq.s32.totalorder %v83, %v946
      %v948 = vsel %vm947, 1, 0
      %949 = vset.pattern.permute.xlu0 0
      %950 = vperm.xlu0 %949, %v948
      %v951 = vpop.permute.xlu0 %950
      %vm952 = vcmp.eq.s32.totalorder %v951, 1
      %v955 = vrot.slane %v945, 7
      %v956 = vsel %vm235, %v955, %v944
      %957 = vrot.lane.b32.xlu0 %v956, 64
      %v958 = vpop.permute.xlu0 %957
      %v960 = vsel %vm952, %v958, %v816
      %s961 = sadd.s32 %s72, 6
      %v962 = vld [vmem:[#allocation7 + $0x6] sm:$0x1]
      %v963 = vld [vmem:[#allocation7 + $0xe] sm:$0x1]
      %v964 = vsel %vm89, %v958, 0
      %966 = vmatprep.subr.mxu0 0.0
      %967 = vmatpush1.msra.mxu0 0.0
      %968 = vmatprep.subr.mxu0 0.0
      %969 = vmatpush1.msra.mxu0 0.0
      %970 = vmatprep.subr.mxu0 0.0
      %971 = vmatpush1.msra.mxu0 0.0
      %972 = vmatprep.subr.mxu0 0.0
      %973 = vmatpush1.msra.mxu0 0.0
      %974 = vmatprep.subr.mxu0 0.0
      %975 = vmatpush1.msra.mxu0 0.0
      %976 = vmatprep.subr.mxu0 0.0
      %977 = vmatpush1.msra.mxu0 0.0
      %978 = vmatprep.subr.mxu0 0.0
      %979 = vmatpush1.msra.mxu0 0.0
      %980 = vmatprep.subr.mxu0 0.0
      %981 = vmatpush1.msra.mxu0 0.0
      %982 = vmatprep.subr.mxu0 0.0
      %983 = vmatpush1.msra.mxu0 0.0
      %984 = vmatprep.subr.mxu0 0.0
      %985 = vmatpush1.msra.mxu0 0.0
      %986 = vmatprep.subr.mxu0 0.0
      %987 = vmatpush1.msra.mxu0 0.0
      %988 = vmatprep.subr.mxu0 0.0
      %989 = vmatpush1.msra.mxu0 0.0
      %990 = vmatprep.subr.mxu0 0.0
      %991 = vmatpush1.msra.mxu0 %v81
      %992 = vmatprep.subr.mxu0 0.0
      %993 = vmatpush1.msra.mxu0 %v80
      %994 = vmatprep.subr.mxu0 0.0
      %995 = vmatpush1.msra.mxu0 %v79
      %996 = vmatprep.subr.mxu0 0.0
      %997 = vmatpush1.msra.mxu0 %v78
      %998 = vmatprep.subr.mxu0 0.0
      %999 = vmatpush2.msra.mxu0 0.0
      %1000 = vmatprep.subr.mxu0 0.0
      %1001 = vmatpush2.msra.mxu0 0.0
      %1002 = vmatprep.subr.mxu0 0.0
      %1003 = vmatpush2.msra.mxu0 0.0
      %1004 = vmatprep.subr.mxu0 0.0
      %1005 = vmatpush2.msra.mxu0 0.0
      %1006 = vmatprep.subr.mxu0 0.0
      %1007 = vmatpush2.msra.mxu0 0.0
      %1008 = vmatprep.subr.mxu0 0.0
      %1009 = vmatpush2.msra.mxu0 0.0
      %1010 = vmatprep.subr.mxu0 0.0
      %1011 = vmatpush2.msra.mxu0 0.0
      %1012 = vmatprep.subr.mxu0 0.0
      %1013 = vmatpush2.msra.mxu0 0.0
      %1014 = vmatprep.subr.mxu0 0.0
      %1015 = vmatpush2.msra.mxu0 0.0
      %1016 = vmatprep.subr.mxu0 0.0
      %1017 = vmatpush2.msra.mxu0 0.0
      %1018 = vmatprep.subr.mxu0 0.0
      %1019 = vmatpush2.msra.mxu0 0.0
      %1020 = vmatprep.subr.mxu0 0.0
      %1021 = vmatpush2.msra.mxu0 0.0
      %1022 = vmatprep.subr.mxu0 0.0
      %1023 = vmatpush2.msra.mxu0 0.0
      %1024 = vmatprep.subr.mxu0 0.0
      %1025 = vmatpush2.msra.mxu0 0.0
      %1026 = vmatprep.subr.mxu0 0.0
      %1027 = vmatpush2.msra.mxu0 0.0
      %1028 = vmatprep.subr.mxu0 0.0
      %1029 = vmatpush2.msra.mxu0 0.0
      %1030 = vmatprep.mubr.f32.mxu0 0.0
      %1031 = vmatmul.mubr.f32.gmra.mxu0 %v964
      %v1032 = vpop.f32.mrf.mxu0
      %v1033 = vadd.f32 0.0, %v1032
      %v1034 = vpop.f32.mrf.mxu0
      %1035 = vdwg.mxu0
      %v1037 = vrot.slane %v1033, 1
      %v1040 = vadd.f32 %v962, %v1033
      %v1041 = vadd.f32 %v963, %v1037
      %v1042 = vxor.u32 %v1040, 2147483648
      %v1043 = vxor.u32 %v1041, 2147483648
      %v1044 = vmul.f32 %v1042, 1.442695
      %v1045 = vpow.pop %v1044
      %v1046 = vmul.f32 %v1043, 1.442695
      %v1047 = vpow.pop %v1046
      %v1048 = vadd.f32 %v1045, 1.0
      %v1049 = vadd.f32 %v1047, 1.0
      %v1050 = vrcp.pop %v1048
      %v1051 = vmul.f32 1.0, %v1050
      %v1052 = vrcp.pop %v1049
      %v1053 = vmul.f32 1.0, %v1052
      %v1054 = vtanh.pop %v1040
      %v1055 = vtanh.pop %v1041
      %v1056 = vmul.f32 %v1051, %v932
      %v1057 = vmul.f32 %v1053, %v933
      %1060 = vrot.lane.b32.xlu0 %v1054, 32
      %v1061 = vpop.permute.xlu0 %1060
      %1062 = vrot.lane.b32.xlu0 %v1055, 32
      %v1063 = vpop.permute.xlu0 %1062
      %v1066 = vmul.f32 %v1051, %v1061
      %v1067 = vmul.f32 %v1053, %v1063
      %1070 = vrot.lane.b32.xlu0 %v1066, 32
      %v1071 = vpop.permute.xlu0 %1070
      %1072 = vrot.lane.b32.xlu0 %v1067, 32
      %v1073 = vpop.permute.xlu0 %1072
      %v1076 = vadd.f32 %v1056, %v1071
      %v1077 = vadd.f32 %v1057, %v1073
      %v1078 = vtanh.pop %v1076
      %v1079 = vtanh.pop %v1077
      %1082 = vrot.lane.b32.xlu0 %v1078, 32
      %v1083 = vpop.permute.xlu0 %1082
      %1084 = vrot.lane.b32.xlu0 %v1079, 32
      %v1085 = vpop.permute.xlu0 %1084
      %v1088 = vmul.f32 %v1051, %v1083
      %v1089 = vmul.f32 %v1053, %v1085
      %v1090 = vstv %s961
      %vm1091 = vcmp.eq.s32.totalorder %v83, %v1090
      %v1092 = vsel %vm1091, 1, 0
      %1093 = vset.pattern.permute.xlu0 0
      %1094 = vperm.xlu0 %1093, %v1092
      %v1095 = vpop.permute.xlu0 %1094
      %vm1096 = vcmp.eq.s32.totalorder %v1095, 1
      %v1099 = vrot.slane %v1089, 7
      %v1100 = vsel %vm235, %v1099, %v1088
      %1101 = vrot.lane.b32.xlu0 %v1100, 64
      %v1102 = vpop.permute.xlu0 %1101
      %v1104 = vsel %vm1096, %v1102, %v960
      %s1105 = sadd.s32 %s72, 7
      %v1106 = vld [vmem:[#allocation7 + $0x7] sm:$0x1]
      %v1107 = vld [vmem:[#allocation7 + $0xf] sm:$0x1]
      %v1108 = vsel %vm89, %v1102, 0
      %1110 = vmatprep.subr.mxu0 0.0
      %1111 = vmatpush1.msra.mxu0 0.0
      %1112 = vmatprep.subr.mxu0 0.0
      %1113 = vmatpush1.msra.mxu0 0.0
      %1114 = vmatprep.subr.mxu0 0.0
      %1115 = vmatpush1.msra.mxu0 0.0
      %1116 = vmatprep.subr.mxu0 0.0
      %1117 = vmatpush1.msra.mxu0 0.0
      %1118 = vmatprep.subr.mxu0 0.0
      %1119 = vmatpush1.msra.mxu0 0.0
      %1120 = vmatprep.subr.mxu0 0.0
      %1121 = vmatpush1.msra.mxu0 0.0
      %1122 = vmatprep.subr.mxu0 0.0
      %1123 = vmatpush1.msra.mxu0 0.0
      %1124 = vmatprep.subr.mxu0 0.0
      %1125 = vmatpush1.msra.mxu0 0.0
      %1126 = vmatprep.subr.mxu0 0.0
      %1127 = vmatpush1.msra.mxu0 0.0
      %1128 = vmatprep.subr.mxu0 0.0
      %1129 = vmatpush1.msra.mxu0 0.0
      %1130 = vmatprep.subr.mxu0 0.0
      %1131 = vmatpush1.msra.mxu0 0.0
      %1132 = vmatprep.subr.mxu0 0.0
      %1133 = vmatpush1.msra.mxu0 0.0
      %1134 = vmatprep.subr.mxu0 0.0
      %1135 = vmatpush1.msra.mxu0 %v81
      %1136 = vmatprep.subr.mxu0 0.0
      %1137 = vmatpush1.msra.mxu0 %v80
      %1138 = vmatprep.subr.mxu0 0.0
      %1139 = vmatpush1.msra.mxu0 %v79
      %1140 = vmatprep.subr.mxu0 0.0
      %1141 = vmatpush1.msra.mxu0 %v78
      %1142 = vmatprep.subr.mxu0 0.0
      %1143 = vmatpush2.msra.mxu0 0.0
      %1144 = vmatprep.subr.mxu0 0.0
      %1145 = vmatpush2.msra.mxu0 0.0
      %1146 = vmatprep.subr.mxu0 0.0
      %1147 = vmatpush2.msra.mxu0 0.0
      %1148 = vmatprep.subr.mxu0 0.0
      %1149 = vmatpush2.msra.mxu0 0.0
      %1150 = vmatprep.subr.mxu0 0.0
      %1151 = vmatpush2.msra.mxu0 0.0
      %1152 = vmatprep.subr.mxu0 0.0
      %1153 = vmatpush2.msra.mxu0 0.0
      %1154 = vmatprep.subr.mxu0 0.0
      %1155 = vmatpush2.msra.mxu0 0.0
      %1156 = vmatprep.subr.mxu0 0.0
      %1157 = vmatpush2.msra.mxu0 0.0
      %1158 = vmatprep.subr.mxu0 0.0
      %1159 = vmatpush2.msra.mxu0 0.0
      %1160 = vmatprep.subr.mxu0 0.0
      %1161 = vmatpush2.msra.mxu0 0.0
      %1162 = vmatprep.subr.mxu0 0.0
      %1163 = vmatpush2.msra.mxu0 0.0
      %1164 = vmatprep.subr.mxu0 0.0
      %1165 = vmatpush2.msra.mxu0 0.0
      %1166 = vmatprep.subr.mxu0 0.0
      %1167 = vmatpush2.msra.mxu0 0.0
      %1168 = vmatprep.subr.mxu0 0.0
      %1169 = vmatpush2.msra.mxu0 0.0
      %1170 = vmatprep.subr.mxu0 0.0
      %1171 = vmatpush2.msra.mxu0 0.0
      %1172 = vmatprep.subr.mxu0 0.0
      %1173 = vmatpush2.msra.mxu0 0.0
      %1174 = vmatprep.mubr.f32.mxu0 0.0
      %1175 = vmatmul.mubr.f32.gmra.mxu0 %v1108
      %v1176 = vpop.f32.mrf.mxu0
      %v1177 = vadd.f32 0.0, %v1176
      %v1178 = vpop.f32.mrf.mxu0
      %1179 = vdwg.mxu0
      %v1181 = vrot.slane %v1177, 1
      %v1184 = vadd.f32 %v1106, %v1177
      %v1185 = vadd.f32 %v1107, %v1181
      %v1186 = vxor.u32 %v1184, 2147483648
      %v1187 = vxor.u32 %v1185, 2147483648
      %v1188 = vmul.f32 %v1186, 1.442695
      %v1189 = vpow.pop %v1188
      %v1190 = vmul.f32 %v1187, 1.442695
      %v1191 = vpow.pop %v1190
      %v1192 = vadd.f32 %v1189, 1.0
      %v1193 = vadd.f32 %v1191, 1.0
      %v1194 = vrcp.pop %v1192
      %v1195 = vmul.f32 1.0, %v1194
      %v1196 = vrcp.pop %v1193
      %v1197 = vmul.f32 1.0, %v1196
      %v1198 = vtanh.pop %v1184
      %v1199 = vtanh.pop %v1185
      %v1200 = vmul.f32 %v1195, %v1076
      %v1201 = vmul.f32 %v1197, %v1077
      %1204 = vrot.lane.b32.xlu0 %v1198, 32
      %v1205 = vpop.permute.xlu0 %1204
      %1206 = vrot.lane.b32.xlu0 %v1199, 32
      %v1207 = vpop.permute.xlu0 %1206
      %v1210 = vmul.f32 %v1195, %v1205
      %v1211 = vmul.f32 %v1197, %v1207
      %1214 = vrot.lane.b32.xlu0 %v1210, 32
      %v1215 = vpop.permute.xlu0 %1214
      %1216 = vrot.lane.b32.xlu0 %v1211, 32
      %v1217 = vpop.permute.xlu0 %1216
      %v1220 = vadd.f32 %v1200, %v1215
      %v1221 = vadd.f32 %v1201, %v1217
      %v1222 = vtanh.pop %v1220
      %v1223 = vtanh.pop %v1221
      %1226 = vrot.lane.b32.xlu0 %v1222, 32
      %v1227 = vpop.permute.xlu0 %1226
      %1228 = vrot.lane.b32.xlu0 %v1223, 32
      %v1229 = vpop.permute.xlu0 %1228
      %v1232 = vmul.f32 %v1195, %v1227
      %v1233 = vmul.f32 %v1197, %v1229
      %v1234 = vstv %s1105
      %vm1235 = vcmp.eq.s32.totalorder %v83, %v1234
      %v1236 = vsel %vm1235, 1, 0
      %1237 = vset.pattern.permute.xlu0 0
      %1238 = vperm.xlu0 %1237, %v1236
      %v1239 = vpop.permute.xlu0 %1238
      %vm1240 = vcmp.eq.s32.totalorder %v1239, 1
      %v1243 = vrot.slane %v1233, 7
      %v1244 = vsel %vm235, %v1243, %v1232
      %1245 = vrot.lane.b32.xlu0 %v1244, 64
      %v1246 = vpop.permute.xlu0 %1245
      %v1248 = vsel %vm1240, %v1246, %v1104
      %vm1249 = vcmask 254976
      %1250 = vst.msk [vmem:[#allocation2] sm:$0x3] %vm1249, %v1246
      %v1253 = vrot.slane %v1221, 7
      %v1254 = vsel %vm235, %v1253, %v1220
      %1255 = vrot.lane.b32.xlu0 %v1254, 96
      %v1256 = vpop.permute.xlu0 %1255
      %1258 = vst.msk [vmem:[#allocation3] sm:$0x3] %vm1249, %v1256
      %1259 = vst.msk [vmem:[#allocation4] sm:$0x3] %vm1249, %v1248
    $region41: #{tpu_custom_call.1} parent=1 // pred_fallthru
      _
    // Predicated region
    $region42: #{tpu_custom_call.1} parent=1 // pred_check
      %p1260 = pneg %p64
    $region43: #{tpu_custom_call.1} parent=1 // pred_check_branch
      %1262 = sbr.rel (%p1260) target = $region45
    $region44: #{tpu_custom_call.1} parent=1 // pred_region
      %v1263 = vld [vmem:[#allocation4] sm:$0x3]
      %v1264 = vld [vmem:[#allocation12] sm:$0xff]
      %v1265 = vld [vmem:[#allocation12 + $0x8] sm:$0xff]
      %v1266 = vld [vmem:[#allocation12 + $0x10] sm:$0xff]
      %v1267 = vld [vmem:[#allocation12 + $0x18] sm:$0xff]
      %v1268 = vld [vmem:[%s5] sm:$0x1]
      %v1270 = vlaneseq
      %v1271 = vshrl.u32 %v1270, 7
      %v1272 = vsub.s32 0, %v1271
      %v1273 = vrot.slane %v1268, %v1272
      %vm1275 = vcmask 261120
      %v1277 = vsel %vm1275, %v1263, 0
      %1279 = vmatprep.subr.mxu0 0.0
      %1280 = vmatpush1.msra.mxu0 0.0
      %1281 = vmatprep.subr.mxu0 0.0
      %1282 = vmatpush1.msra.mxu0 0.0
      %1283 = vmatprep.subr.mxu0 0.0
      %1284 = vmatpush1.msra.mxu0 0.0
      %1285 = vmatprep.subr.mxu0 0.0
      %1286 = vmatpush1.msra.mxu0 0.0
      %1287 = vmatprep.subr.mxu0 0.0
      %1288 = vmatpush1.msra.mxu0 0.0
      %1289 = vmatprep.subr.mxu0 0.0
      %1290 = vmatpush1.msra.mxu0 0.0
      %1291 = vmatprep.subr.mxu0 0.0
      %1292 = vmatpush1.msra.mxu0 0.0
      %1293 = vmatprep.subr.mxu0 0.0
      %1294 = vmatpush1.msra.mxu0 0.0
      %1295 = vmatprep.subr.mxu0 0.0
      %1296 = vmatpush1.msra.mxu0 0.0
      %1297 = vmatprep.subr.mxu0 0.0
      %1298 = vmatpush1.msra.mxu0 0.0
      %1299 = vmatprep.subr.mxu0 0.0
      %1300 = vmatpush1.msra.mxu0 0.0
      %1301 = vmatprep.subr.mxu0 0.0
      %1302 = vmatpush1.msra.mxu0 0.0
      %1303 = vmatprep.subr.mxu0 0.0
      %1304 = vmatpush1.msra.mxu0 %v1267
      %1305 = vmatprep.subr.mxu0 0.0
      %1306 = vmatpush1.msra.mxu0 %v1266
      %1307 = vmatprep.subr.mxu0 0.0
      %1308 = vmatpush1.msra.mxu0 %v1265
      %1309 = vmatprep.subr.mxu0 0.0
      %1310 = vmatpush1.msra.mxu0 %v1264
      %1311 = vmatprep.subr.mxu0 0.0
      %1312 = vmatpush2.msra.mxu0 0.0
      %1313 = vmatprep.subr.mxu0 0.0
      %1314 = vmatpush2.msra.mxu0 0.0
      %1315 = vmatprep.subr.mxu0 0.0
      %1316 = vmatpush2.msra.mxu0 0.0
      %1317 = vmatprep.subr.mxu0 0.0
      %1318 = vmatpush2.msra.mxu0 0.0
      %1319 = vmatprep.subr.mxu0 0.0
      %1320 = vmatpush2.msra.mxu0 0.0
      %1321 = vmatprep.subr.mxu0 0.0
      %1322 = vmatpush2.msra.mxu0 0.0
      %1323 = vmatprep.subr.mxu0 0.0
      %1324 = vmatpush2.msra.mxu0 0.0
      %1325 = vmatprep.subr.mxu0 0.0
      %1326 = vmatpush2.msra.mxu0 0.0
      %1327 = vmatprep.subr.mxu0 0.0
      %1328 = vmatpush2.msra.mxu0 0.0
      %1329 = vmatprep.subr.mxu0 0.0
      %1330 = vmatpush2.msra.mxu0 0.0
      %1331 = vmatprep.subr.mxu0 0.0
      %1332 = vmatpush2.msra.mxu0 0.0
      %1333 = vmatprep.subr.mxu0 0.0
      %1334 = vmatpush2.msra.mxu0 0.0
      %1335 = vmatprep.subr.mxu0 0.0
      %1336 = vmatpush2.msra.mxu0 0.0
      %1337 = vmatprep.subr.mxu0 0.0
      %1338 = vmatpush2.msra.mxu0 0.0
      %1339 = vmatprep.subr.mxu0 0.0
      %1340 = vmatpush2.msra.mxu0 0.0
      %1341 = vmatprep.subr.mxu0 0.0
      %1342 = vmatpush2.msra.mxu0 0.0
      %1343 = vmatprep.mubr.f32.mxu0 0.0
      %1344 = vmatmul.mubr.f32.gmra.mxu0 %v1277
      %v1345 = vpop.f32.mrf.mxu0
      %v1346 = vadd.f32 %v1273, %v1345
      %v1347 = vpop.f32.mrf.mxu0
      %1348 = vdwg.mxu0
      %v1349 = vmax.f32 %v1346, 0.0
      %1350 = vst [vmem:[#allocation13] sm:$0x3] %v1349
    $region45: #{tpu_custom_call.1} parent=1 // pred_fallthru
      _
    // Predicated region
    $region46: #{tpu_custom_call.1} parent=1 // pred_check
      _
    $region47: #{tpu_custom_call.1} parent=1 // pred_check_branch
      %1352 = sbr.rel (0) target = $region49
    $region48: #{tpu_custom_call.1} parent=1 // pred_region
      %s1354 = ssub.s32 32, 32
      %1355 = vsyncadd [#allocation9], %s1354
      %s1357 = sshll.u32 [#allocation13], 4
      %s1358 = int_to_ptr.vmem [resolvable:$true] %s1357
      %1360 = dma.vmem_to_hbm [thread:$0]  %s1358, 32, %s6, [#allocation9]
    $region49: #{tpu_custom_call.1} parent=1 // pred_fallthru
      _
    // Predicated region
    $region50: #{tpu_custom_call.1} parent=1 // pred_check
      _
    $region51: #{tpu_custom_call.1} parent=1 // pred_check_branch
      %1362 = sbr.rel (0) target = $region53
    $region52: #{tpu_custom_call.1} parent=1 // pred_region
      %1363 = dma.done [#allocation9], 32
    $region53: #{tpu_custom_call.1} parent=1 // pred_fallthru
      _
    %1364 = vsyncpa [#allocation8], 1
    %1365 = vsyncpa [#allocation11], 1
    %1366 = vsyncpa [#allocation9], 1

</llo_original>
